<compile_context>
chip_gen: v5e
topology: v5e:2x2
jax: 0.10.0
libtpu: 0.0.40
codegen_flags: <defaults>
</compile_context>

<pallas_src>
import functools

import jax
import jax.numpy as jnp
from jax.experimental import pallas as pl
from jax.experimental.pallas import tpu as pltpu


def _round_up(x, m):
    return (x + m - 1) // m * m


# ---------------------------------------------------------------------------
# Hardware queries (cached) & tiling helpers
# ---------------------------------------------------------------------------
_VMEM_CAP = [None]
_IS_V7X = [None]


def _vmem_cap():
    if _VMEM_CAP[0] is None:
        try:
            _VMEM_CAP[0] = int(pltpu.get_tpu_info().vmem_capacity_bytes)
        except Exception:
            _VMEM_CAP[0] = 64 * 1024 * 1024      # conservative (v7x per-TC)
    return _VMEM_CAP[0]


def _is_v7x():
    if _IS_V7X[0] is None:
        try:
            _IS_V7X[0] = "v7" in jax.devices()[0].device_kind.lower()
        except Exception:
            _IS_V7X[0] = False
    return _IS_V7X[0]


def _sems(n_parallel, n_arbitrary=0, lead_size=None):
    """dimension_semantics; on v7x shard the leading axis across both TCs."""
    sems = ["parallel"] * n_parallel + ["arbitrary"] * n_arbitrary
    if (_is_v7x() and n_parallel >= 1 and lead_size is not None
            and lead_size >= 2 and lead_size % 2 == 0):
        sems[0] = getattr(pltpu, "CORE_PARALLEL", "parallel")
    return tuple(sems)


def _vmem_limit(est_bytes):
    cap = _vmem_cap()
    return int(min(max(2 * est_bytes + (8 << 20), 32 << 20), cap * 17 // 20))


def _tn_for(Np):
    return max(t for t in (512, 256, 128) if Np % t == 0)


def _pick_tiles(M, K, Np):
    """(tm, tk, tn, footprint) for the generic matmul.  tk = full K (so ragged
    K never needs a padded-A copy) or the largest 128-multiple divisor of K;
    tm grows on 128MiB-VMEM parts and is capped for v7x's 64MiB."""
    cap = _vmem_cap()
    big = cap >= (100 << 20)
    tn = _tn_for(Np)
    max_tk = 2048 if big else 1024
    if K % 128 != 0 or K <= max_tk:
        tk = K
    else:
        tk = max(t for t in range(128, max_tk + 1, 128) if K % t == 0)
    tm = min(1024 if big else 512, _round_up(M, 8))

    def fp(tm_):
        return (2 * (tm_ * tk + tk * tn) * 2 + tm_ * tn * 4
                + 2 * tm_ * tn * 2 + 4 * tn * 4)

    while fp(tm) > cap // 2 and tm > 256:
        tm = _round_up(tm // 2, 8)
    return tm, tk, tn, fp(tm)


def _fused3x3_footprint(H, W, cin, cout):
    Wp = W + 2
    rows_in = (H + 3) * Wp
    rows_out = H * Wp
    tn = _tn_for(_round_up(cout, 128))
    cpad = _round_up(cin, 128)
    return (2 * rows_in * cpad * 2 + 2 * 9 * cin * tn * 2
            + rows_out * tn * 4 + rows_out * cpad * 2 + 2 * rows_out * tn * 2)


def _fused3x3_fits(xshape, cin, cout):
    _, H, W, _ = xshape
    return _fused3x3_footprint(H, W, cin, cout) <= int(0.45 * _vmem_cap())


# ---------------------------------------------------------------------------
# Pallas kernels
# ---------------------------------------------------------------------------
def _apply_act(y, act):
    if act == "mish":
        # mish(y) = y * tanh(softplus(y)) = y * (e^2 + 2e) / (e^2 + 2e + 2)
        # with e = exp(y); clamp avoids f32 overflow (ratio -> 1 for large y).
        e = jnp.exp(jnp.minimum(y, 20.0))
        num = e * (e + 2.0)
        return y * num * pl.reciprocal(num + 2.0, approx=True)
    if act == "leaky":
        return jnp.where(y >= 0.0, y, 0.1 * y)
    return y  # identity


def _mm_bn_act_kernel(a_ref, b_ref, s_ref, c_ref, o_ref, acc_ref, *, act, nk):
    """o = act((A @ B) * scale + bias); f32 accumulation in VMEM scratch,
    bf16 output written on the last K step only."""
    kk = pl.program_id(2)

    @pl.when(kk == 0)
    def _():
        acc_ref[...] = jnp.zeros_like(acc_ref)

    acc_ref[...] += jnp.dot(a_ref[...], b_ref[...],
                            preferred_element_type=jnp.float32)

    @pl.when(kk == nk - 1)
    def _():
        y = acc_ref[...] * s_ref[...] + c_ref[...]
        o_ref[...] = _apply_act(y, act).astype(o_ref.dtype)


def _mm_multi_kernel(*refs, act, n_in):
    """o = act((sum_i A_i @ B_i) * scale + bias) -- the consuming conv of a
    channel concat, with the concat never materialized."""
    s_ref, c_ref, o_ref = refs[-3], refs[-2], refs[-1]
    acc = jnp.zeros(o_ref.shape, jnp.float32)
    for i in range(n_in):
        acc = acc + jnp.dot(refs[2 * i][...], refs[2 * i + 1][...],
                            preferred_element_type=jnp.float32)
    y = acc * s_ref[...] + c_ref[...]
    o_ref[...] = _apply_act(y, act).astype(o_ref.dtype)


def _conv3s1_kernel(x_ref, b_ref, s_ref, c_ref, o_ref, *, H, Wp, act):
    """Fused 3x3 stride-1 conv.  x_ref holds the flattened zero-padded image
    of one batch element; each of the 9 taps is a row-shifted slice of it."""
    rows = H * Wp
    acc = jnp.zeros(o_ref.shape, jnp.float32)
    for dy in range(3):
        for dx in range(3):
            a = x_ref[pl.ds(dy * Wp + dx, rows), :]
            acc = acc + jnp.dot(a, b_ref[3 * dy + dx],
                                preferred_element_type=jnp.float32)
    y = acc * s_ref[...] + c_ref[...]
    o_ref[...] = _apply_act(y, act).astype(o_ref.dtype)


def _spp_kernel(x_ref, o5_ref, o9_ref, o13_ref, *, H, W):
    """Cascaded SPP max-pools (5 -> 9 -> 13), separable row/col maxes.
    x_ref: (H+12, W+12, Cb), padded with -inf; one batch / channel tile."""
    x = x_ref[...]

    def pool5(v, h, w):                        # 5-tap max over (h+4, w+4)
        cm = v[:, 0:w, :]
        for j in range(1, 5):
            cm = jnp.maximum(cm, v[:, j:j + w, :])
        out = cm[0:h, :, :]
        for i in range(1, 5):
            out = jnp.maximum(out, cm[i:i + h, :, :])
        return out

    p5e = pool5(x, H + 8, W + 8)               # maxpool5, extended by +-4
    p9e = pool5(p5e, H + 4, W + 4)             # maxpool9  = 5 o 5
    p13 = pool5(p9e, H, W)                     # maxpool13 = 5 o 9
    o5_ref[...] = p5e[4:4 + H, 4:4 + W, :]
    o9_ref[...] = p9e[2:2 + H, 2:2 + W, :]
    o13_ref[...] = p13


# ---------------------------------------------------------------------------
# Pallas wrappers
# ---------------------------------------------------------------------------
def _matmul_bn_act(a, w, s, c, *, act, cout):
    """a: (M, K) bf16 (K exact, no padding); w: (K, Np) bf16; s/c: (1, Np)."""
    M, K = a.shape
    Np = w.shape[1]
    tm, tk, tn, est = _pick_tiles(M, K, Np)
    nm, nn, nk = pl.cdiv(M, tm), Np // tn, K // tk
    return pl.pallas_call(
        functools.partial(_mm_bn_act_kernel, act=act, nk=nk),
        out_shape=jax.ShapeDtypeStruct((M, cout), jnp.bfloat16),
        grid=(nm, nn, nk),
        in_specs=[pl.BlockSpec((tm, tk), lambda i, j, kk: (i, kk)),
                  pl.BlockSpec((tk, tn), lambda i, j, kk: (kk, j)),
                  pl.BlockSpec((1, tn), lambda i, j, kk: (0, j)),
                  pl.BlockSpec((1, tn), lambda i, j, kk: (0, j))],
        out_specs=pl.BlockSpec((tm, tn), lambda i, j, kk: (i, j)),
        scratch_shapes=[pltpu.VMEM((tm, tn), jnp.float32)],
        compiler_params=pltpu.CompilerParams(
            dimension_semantics=_sems(2, 1, lead_size=nm),
            vmem_limit_bytes=_vmem_limit(est)),
    )(a, w, s, c)


def _matmul_multi_bn_act(a_list, w_list, s, c, *, act, cout):
    M = a_list[0].shape[0]
    Np = w_list[0].shape[1]
    cap = _vmem_cap()
    tn = _tn_for(Np)
    tm = min(1024 if cap >= (100 << 20) else 512, _round_up(M, 8))

    def fp(tm_):
        t = tm_ * tn * 4 + 2 * tm_ * tn * 2 + 4 * tn * 4
        for w in w_list:
            t += 2 * (tm_ * w.shape[0] + w.shape[0] * tn) * 2
        return t

    while fp(tm) > cap // 2 and tm > 256:
        tm = _round_up(tm // 2, 8)
    nm, nn = pl.cdiv(M, tm), Np // tn
    in_specs, args = [], []
    for a, w in zip(a_list, w_list):
        in_specs.append(pl.BlockSpec((tm, a.shape[1]), lambda i, j: (i, 0)))
        in_specs.append(pl.BlockSpec((w.shape[0], tn), lambda i, j: (0, j)))
        args += [a, w]
    in_specs += [pl.BlockSpec((1, tn), lambda i, j: (0, j))] * 2
    args += [s, c]
    return pl.pallas_call(
        functools.partial(_mm_multi_kernel, act=act, n_in=len(a_list)),
        out_shape=jax.ShapeDtypeStruct((M, cout), jnp.bfloat16),
        grid=(nm, nn),
        in_specs=in_specs,
        out_specs=pl.BlockSpec((tm, tn), lambda i, j: (i, j)),
        compiler_params=pltpu.CompilerParams(
            dimension_semantics=_sems(2, lead_size=nm),
            vmem_limit_bytes=_vmem_limit(fp(tm))),
    )(*args)


@functools.partial(jax.jit, static_argnames=("act", "cout"))
def _conv1x1_nhwc(x, w, s, c, *, act, cout):
    N, H, W, C = x.shape
    a = x.reshape(N * H * W, C).astype(jnp.bfloat16)
    out = _matmul_bn_act(a, w, s, c, act=act, cout=cout)
    return out.reshape(N, H, W, cout)


@functools.partial(jax.jit, static_argnames=("act", "cout"))
def _conv3x3s1_fused(x, w, s, c, *, act, cout):
    """im2col-free 3x3 stride-1 conv: the zero-padded NHWC activation is
    flattened per batch; the 9 taps are row-shifted slices of the same
    VMEM-resident block.  Columns {W, W+1} of each output row are wrap-around
    garbage and are cropped afterwards."""
    N, H, W, C = x.shape
    x = x.astype(jnp.bfloat16)
    Wp = W + 2
    rows_in = (H + 3) * Wp          # 1 top pad row + 2 bottom rows (tap overrun)
    rows_out = H * Wp
    Np = w.shape[1]
    tn = _tn_for(Np)
    nn = Np // tn
    xp = jnp.pad(x, ((0, 0), (1, 2), (1, 1), (0, 0))).reshape(N, rows_in, C)
    w9 = w.reshape(9, C, Np)
    est = _fused3x3_footprint(H, W, C, cout)
    out = pl.pallas_call(
        functools.partial(_conv3s1_kernel, H=H, Wp=Wp, act=act),
        out_shape=jax.ShapeDtypeStruct((N, rows_out, cout), jnp.bfloat16),
        grid=(N, nn),
        in_specs=[pl.BlockSpec((None, rows_in, C), lambda n, j: (n, 0, 0)),
                  pl.BlockSpec((9, C, tn), lambda n, j: (0, 0, j)),
                  pl.BlockSpec((1, tn), lambda n, j: (0, j)),
                  pl.BlockSpec((1, tn), lambda n, j: (0, j))],
        out_specs=pl.BlockSpec((None, rows_out, tn), lambda n, j: (n, 0, j)),
        compiler_params=pltpu.CompilerParams(
            dimension_semantics=_sems(2, lead_size=N),
            vmem_limit_bytes=_vmem_limit(est)),
    )(xp, w9, s, c)
    return out.reshape(N, H, Wp, cout)[:, :, :W, :]


@functools.partial(jax.jit, static_argnames=("k", "stride", "act", "cout"))
def _conv_im2col(x, w, s, c, *, k, stride, act, cout):
    """Fallback conv: XLA im2col patch gather + fused Pallas matmul.  Used for
    stride-2 convs, the 3-channel stem and oversized 3x3 maps.  Patches are
    materialized already K-padded (zero chunk in the same concatenate)."""
    N, H, W, C = x.shape
    x = x.astype(jnp.bfloat16)
    p = k // 2
    Ho = (H + 2 * p - k) // stride + 1
    Wo = (W + 2 * p - k) // stride + 1
    K = k * k * C
    Kp = _round_up(K, 128)
    if k == 1 and stride == 1:
        pat = x
    else:
        # TODO(synk): weights are tap-major (kh*kw, cin); real pretrained
        # PyTorch weights (cout, cin, kh, kw) would need reordering.
        xp = jnp.pad(x, ((0, 0), (p, p), (p, p), (0, 0)))
        cols = [xp[:, i:i + (Ho - 1) * stride + 1:stride,
                   j:j + (Wo - 1) * stride + 1:stride, :]
                for i in range(k) for j in range(k)]
        pat = jnp.stack(cols, axis=3).reshape(N, Ho, Wo, K)
    if Kp > K:
        pat = jnp.concatenate(
            [pat, jnp.zeros((N, Ho, Wo, Kp - K), pat.dtype)], axis=-1)
        w = jnp.pad(w, ((0, Kp - K), (0, 0)))
    out = _matmul_bn_act(pat.reshape(N * Ho * Wo, Kp), w, s, c,
                         act=act, cout=cout)
    return out.reshape(N, Ho, Wo, cout)


@functools.partial(jax.jit, static_argnames=("act", "cout"))
def _mconv_nhwc(xs, ws, s, c, *, act, cout):
    N, H, W, _ = xs[0].shape
    a_list = [x.reshape(N * H * W, x.shape[-1]).astype(jnp.bfloat16)
              for x in xs]
    out = _matmul_multi_bn_act(a_list, list(ws), s, c, act=act, cout=cout)
    return out.reshape(N, H, W, cout)


@jax.jit
def _spp_pools(x):
    """(maxpool5(x), maxpool9(x), maxpool13(x)), one fused Pallas call."""
    N, H, W, C = x.shape
    P = 6
    xp = jnp.pad(x, ((0, 0), (P, P), (P, P), (0, 0)),
                 constant_values=-jnp.inf)
    Cb = 128 if C % 128 == 0 else C
    return pl.pallas_call(
        functools.partial(_spp_kernel, H=H, W=W),
        out_shape=tuple(jax.ShapeDtypeStruct((N, H, W, C), x.dtype)
                        for _ in range(3)),
        grid=(N, C // Cb),
        in_specs=[pl.BlockSpec((None, H + 2 * P, W + 2 * P, Cb),
                               lambda n, cb: (n, 0, 0, cb))],
        out_specs=tuple(pl.BlockSpec((None, H, W, Cb),
                                     lambda n, cb: (n, 0, 0, cb))
                        for _ in range(3)),
        compiler_params=pltpu.CompilerParams(
            dimension_semantics=_sems(2, lead_size=N)),
    )(xp)


def _spp_pools_xla(x):  # safety-net fallback
    xf = x.astype(jnp.float32)

    def mp(k):
        return jax.lax.reduce_window(xf, -jnp.inf, jax.lax.max,
                                     (1, k, k, 1), (1, 1, 1, 1), "SAME")

    return tuple(mp(k).astype(x.dtype) for k in (5, 9, 13))


# ---------------------------------------------------------------------------
# Dispatchers (with safety-net fallbacks so a lowering issue on an untested
# chip degrades to the simpler path instead of failing the whole forward)
# ---------------------------------------------------------------------------
_FUSED3_OK = [True]
_DIRECT1_OK = [True]
_MCONV_OK = [True]
_SPP_OK = [True]


def apply_conv(p, x):
    k, st = p["k"], p["s"]
    w, s, c, act, cout = p["w"], p["scale"], p["bias"], p["act"], p["cout"]
    if (k == 3 and st == 1 and p["cin"] >= 16 and _FUSED3_OK[0]
            and _fused3x3_fits(x.shape, p["cin"], cout)):
        try:
            return _conv3x3s1_fused(x, w, s, c, act=act, cout=cout)
        except Exception:
            _FUSED3_OK[0] = False
    if k == 1 and st == 1 and _DIRECT1_OK[0]:
        try:
            return _conv1x1_nhwc(x, w, s, c, act=act, cout=cout)
        except Exception:
            _DIRECT1_OK[0] = False
    return _conv_im2col(x, w, s, c, k=k, stride=st, act=act, cout=cout)


def apply_mconv(p, xs):
    if _MCONV_OK[0]:
        try:
            return _mconv_nhwc(tuple(xs), p["ws"], p["scale"], p["bias"],
                               act=p["act"], cout=p["cout"])
        except Exception:
            _MCONV_OK[0] = False
    x = jnp.concatenate(list(xs), axis=-1)
    merged = {"kind": "conv", "w": jnp.concatenate(list(p["ws"]), axis=0),
              "scale": p["scale"], "bias": p["bias"], "act": p["act"],
              "cout": p["cout"], "k": 1, "s": 1, "cin": x.shape[-1]}
    return apply_conv(merged, x)


def spp_pools(x):
    if _SPP_OK[0]:
        try:
            return _spp_pools(x)
        except Exception:
            _SPP_OK[0] = False
    return _spp_pools_xla(x)


# ---------------------------------------------------------------------------
# Parameter construction (deterministic, synthetic; weights pre-cast to bf16)
# ---------------------------------------------------------------------------
class _KeyGen:
    def __init__(self, seed):
        self._key = jax.random.PRNGKey(seed)

    def __call__(self):
        self._key, sub = jax.random.split(self._key)
        return sub


def _make_conv_params(kg, cin, cout, k, s, *, act, w_std, bias=None,
                      scale=None):
    K = k * k * cin
    Np = _round_up(cout, 128)
    w = jax.random.normal(kg(), (K, cout), jnp.float32) * w_std
    w_p = jnp.zeros((K, Np), jnp.bfloat16).at[:, :cout].set(
        w.astype(jnp.bfloat16))
    sc = jnp.ones((cout,), jnp.float32) if scale is None else scale
    bi = jnp.zeros((cout,), jnp.float32) if bias is None else bias
    s_p = jnp.zeros((1, Np), jnp.float32).at[0, :cout].set(sc)
    c_p = jnp.zeros((1, Np), jnp.float32).at[0, :cout].set(bi)
    return {"kind": "conv", "w": w_p, "scale": s_p, "bias": c_p,
            "k": k, "s": s, "act": act, "cout": cout, "cin": cin}


def make_conv(kg, cin, cout, k, s, mish=False):
    """C.Conv = Conv2d(bias=False) + folded eval-mode BN + Mish/LeakyReLU."""
    fan_in = cin * k * k
    return _make_conv_params(kg, cin, cout, k, s,
                             act="mish" if mish else "leaky",
                             w_std=(2.0 / fan_in) ** 0.5)


def make_head_conv(kg, cin, cout):
    """Plain nn.Conv2d(cin, cout, 1, 1) with bias, no BN, no activation."""
    b = jax.random.normal(kg(), (cout,), jnp.float32) * 0.01
    return _make_conv_params(kg, cin, cout, 1, 1, act="identity",
                             w_std=(1.0 / cin) ** 0.5, bias=b)


def make_conv_split(kg, cins, cout, mish=False):
    """C.Conv(sum(cins), cout, 1, 1) whose input is a channel concat; weight
    pre-split along K so the concat is never materialized."""
    cin = sum(cins)
    p = _make_conv_params(kg, cin, cout, 1, 1,
                          act="mish" if mish else "leaky",
                          w_std=(2.0 / cin) ** 0.5)
    ws, off = [], 0
    for ci in cins:
        ws.append(p["w"][off:off + ci])
        off += ci
    return {"kind": "mconv", "ws": tuple(ws), "scale": p["scale"],
            "bias": p["bias"], "act": p["act"], "cout": cout}


def make_csp(kg, c1, c2, mish=True):
    c_ = c2 // 2
    act = "mish" if mish else "leaky"
    # cv2/cv3 are raw convs in torch; the post-concat BN (identity in eval
    # with synthetic params) + activation is fused per-half into their
    # epilogues.  cv4 consumes the (y1, y2) "concat" as a 2-input matmul.
    return {"kind": "csp",
            "cv1": make_conv(kg, c1, c_, 1, 1, mish),
            "cv2": _make_conv_params(kg, c1, c_, 1, 1, act=act,
                                     w_std=(1.0 / c1) ** 0.5),
            "cv3": _make_conv_params(kg, c_, c_, 1, 1, act=act,
                                     w_std=(1.0 / c_) ** 0.5),
            "cv4": make_conv_split(kg, (c_, c_), c2, mish),
            "m1": make_conv(kg, c_, c_, 1, 1, mish),   # Bottleneck cv1
            "m2": make_conv(kg, c_, c_, 3, 1, mish)}   # Bottleneck cv2


def make_spp(kg, c1, c2):
    c_ = c1 // 2
    return {"kind": "spp",
            "cv1": make_conv(kg, c1, c_, 1, 1, False),
            "cv2": make_conv_split(kg, (c_, c_, c_, c_), c2, False)}


def make_yolov4(seed=0):
    kg = _KeyGen(seed)
    m = {}
    m["input"] = [make_conv(kg, 3, 32, 3, 1, True)]
    m["group0"] = [make_conv(kg, 32, 64, 3, 2, True), make_csp(kg, 64, 64, True)]
    m["group1"] = [make_conv(kg, 64, 128, 3, 2, True)] + \
                  [make_csp(kg, 128, 128, True) for _ in range(2)]
    m["group2"] = [make_conv(kg, 128, 256, 3, 2, True)] + \
                  [make_csp(kg, 256, 256, True) for _ in range(8)]
    m["group3"] = [make_conv(kg, 256, 512, 3, 2, True)] + \
                  [make_csp(kg, 512, 512, True) for _ in range(8)]
    m["group4"] = [make_conv(kg, 512, 1024, 3, 2, True)] + \
                  [make_csp(kg, 1024, 1024, True) for _ in range(4)]
    m["spp"] = [make_conv(kg, 1024, 512, 1, 1), make_conv(kg, 512, 1024, 3, 1),
                make_spp(kg, 1024, 512),
                make_conv(kg, 512, 1024, 3, 1), make_conv(kg, 1024, 512, 1, 1)]
    m["neck0"] = make_conv(kg, 512, 256, 1, 1)
    m["neck0route"] = make_conv(kg, 512, 256, 1, 1)
    m["neck1"] = [make_conv_split(kg, (256, 256), 256),
                  make_conv(kg, 256, 512, 3, 1), make_conv(kg, 512, 256, 1, 1),
                  make_conv(kg, 256, 512, 3, 1), make_conv(kg, 512, 256, 1, 1)]
    m["neck2"] = make_conv(kg, 256, 128, 1, 1)
    m["neck2route"] = make_conv(kg, 256, 128, 1, 1)
    m["neck3"] = [make_conv_split(kg, (128, 128), 128),
                  make_conv(kg, 128, 256, 3, 1), make_conv(kg, 256, 128, 1, 1),
                  make_conv(kg, 128, 256, 3, 1), make_conv(kg, 256, 128, 1, 1)]
    m["head0"] = [make_conv(kg, 128, 256, 3, 1), make_head_conv(kg, 256, 75)]
    m["neck3route"] = make_conv(kg, 128, 256, 3, 2)
    m["neck4"] = [make_conv_split(kg, (256, 256), 256),
                  make_conv(kg, 256, 512, 3, 1), make_conv(kg, 512, 256, 1, 1),
                  make_conv(kg, 256, 512, 3, 1), make_conv(kg, 512, 256, 1, 1)]
    m["head1"] = [make_conv(kg, 256, 512, 3, 1), make_head_conv(kg, 512, 75)]
    m["neck4route"] = make_conv(kg, 256, 512, 3, 2)
    m["neck5"] = [make_conv_split(kg, (512, 512), 512),
                  make_conv(kg, 512, 1024, 3, 1), make_conv(kg, 1024, 512, 1, 1),
                  make_conv(kg, 512, 1024, 3, 1), make_conv(kg, 1024, 512, 1, 1)]
    m["head2"] = [make_conv(kg, 512, 1024, 3, 1), make_head_conv(kg, 1024, 75)]
    return m


# ---------------------------------------------------------------------------
# Forward pass (mirrors the PyTorch module graph)
# ---------------------------------------------------------------------------
def apply_csp(p, x):
    y1 = apply_conv(p["cv1"], x)
    y1 = y1 + apply_conv(p["m2"], apply_conv(p["m1"], y1))  # Bottleneck
    y1 = apply_conv(p["cv3"], y1)     # post-concat BN (half 1) + act fused
    y2 = apply_conv(p["cv2"], x)      # post-concat BN (half 2) + act fused
    return apply_mconv(p["cv4"], (y1, y2))                   # no concat


def apply_spp(p, x):
    x = apply_conv(p["cv1"], x)
    p5, p9, p13 = spp_pools(x)
    return apply_mconv(p["cv2"], (x, p5, p9, p13))           # no concat


def apply_block(p, x):
    kind = p["kind"]
    if kind == "conv":
        return apply_conv(p, x)
    if kind == "csp":
        return apply_csp(p, x)
    if kind == "spp":
        return apply_spp(p, x)
    raise ValueError(kind)


def apply_seq(seq, x):
    for p in seq:
        x = apply_block(p, x)
    return x


def upsample2_nearest(x):   # nn.Upsample(scale_factor=2, mode='nearest'), NHWC
    return jnp.repeat(jnp.repeat(x, 2, axis=1), 2, axis=2)


def yolov4_forward(m, x_nchw):
    x = jnp.transpose(x_nchw, (0, 2, 3, 1)).astype(jnp.bfloat16)  # NCHW->NHWC
    x0 = apply_seq(m["input"], x)
    x1 = apply_seq(m["group0"], x0)
    x2 = apply_seq(m["group1"], x1)
    x3 = apply_seq(m["group2"], x2)
    x4 = apply_seq(m["group3"], x3)
    x5 = apply_seq(m["group4"], x4)
    x6 = apply_seq(m["spp"], x5)
    x7 = apply_conv(m["neck0"], x6)
    x8 = upsample2_nearest(x7)
    x9 = apply_conv(m["neck0route"], x4)
    x11 = apply_seq(m["neck1"][1:], apply_mconv(m["neck1"][0], (x9, x8)))
    x12 = apply_conv(m["neck2"], x11)
    x13 = upsample2_nearest(x12)
    x14 = apply_conv(m["neck2route"], x3)
    x16 = apply_seq(m["neck3"][1:], apply_mconv(m["neck3"][0], (x14, x13)))
    head0 = apply_seq(m["head0"], x16)
    x17 = apply_conv(m["neck3route"], x16)
    x19 = apply_seq(m["neck4"][1:], apply_mconv(m["neck4"][0], (x17, x11)))
    head1 = apply_seq(m["head1"], x19)
    x20 = apply_conv(m["neck4route"], x19)
    x22 = apply_seq(m["neck5"][1:], apply_mconv(m["neck5"][0], (x20, x6)))
    head2 = apply_seq(m["head2"], x22)

    def flat(h):  # NHWC -> NCHW, then .view(N, -1) like the torch code
        return jnp.transpose(h, (0, 3, 1, 2)).reshape(
            h.shape[0], -1).astype(jnp.float32)

    return flat(head0), flat(head1), flat(head2)


if __name__ == "__main__":
    # Small input: batch=2, 3 channels, 32x32 spatial (divisible by 2**5).
    x = jax.random.normal(jax.random.PRNGKey(0), (2, 3, 32, 32), jnp.float32)
    model = make_yolov4(seed=0)
    h0, h1, h2 = yolov4_forward(model, x)
    jax.block_until_ready((h0, h1, h2))
    assert h0.shape == (2, 75 * 4 * 4)
    assert h1.shape == (2, 75 * 2 * 2)
    assert h2.shape == (2, 75 * 1 * 1)
    print("KERNEL_OK")
</pallas_src>

<mosaic_0001>
module attributes {stable_mosaic.version = 11 : i64} {
  func.func @_mm_bn_act_kernel(%arg0: i32, %arg1: i32, %arg2: i32, %arg3: memref<512x128xbf16, #tpu.memory_space<vmem>>, %arg4: memref<128x128xbf16, #tpu.memory_space<vmem>>, %arg5: memref<1x128xf32, #tpu.memory_space<vmem>>, %arg6: memref<1x128xf32, #tpu.memory_space<vmem>>, %arg7: memref<512x128xbf16, #tpu.memory_space<vmem>>, %arg8: memref<512x128xf32, #tpu.memory_space<vmem>>) attributes {dimension_semantics = [#tpu.dimension_semantics<parallel>, #tpu.dimension_semantics<parallel>, #tpu.dimension_semantics<arbitrary>], iteration_bounds = array<i64: 4, 1, 1>, scalar_prefetch = 0 : i64, scratch_operands = 1 : i64, tpu.core_type = #tpu.core_type<tc>, window_params = [{transform_indices = @transform_0, window_bounds = array<i64: 512, 128>}, {transform_indices = @transform_1, window_bounds = array<i64: 128, 128>}, {transform_indices = @transform_2, window_bounds = array<i64: 1, 128>}, {transform_indices = @transform_3, window_bounds = array<i64: 1, 128>}, {transform_indices = @transform_4, window_bounds = array<i64: 512, 128>}]} {
    %c0_i32 = arith.constant 0 : i32
    %0 = arith.cmpi eq, %arg2, %c0_i32 : i32
    %1 = arith.extui %0 : i1 to i32
    %c0_i32_0 = arith.constant 0 : i32
    %2 = arith.cmpi ne, %1, %c0_i32_0 : i32
    scf.if %2 {
      %cst_10 = arith.constant 0.000000e+00 : f32
      %12 = vector.broadcast %cst_10 : f32 to vector<512x128xf32>
      %c0_11 = arith.constant 0 : index
      %c0_12 = arith.constant 0 : index
      %13 = vector.load %arg8[%c0_11, %c0_12] : memref<512x128xf32, #tpu.memory_space<vmem>>, vector<512x128xf32>
      tpu.vector_store %arg8[%c0_11, %c0_12], %12 {strides = array<i32>} : memref<512x128xf32, #tpu.memory_space<vmem>>, vector<512x128xf32>,
    } else {
    }
    %c0 = arith.constant 0 : index
    %c0_1 = arith.constant 0 : index
    %3 = vector.load %arg8[%c0, %c0_1] : memref<512x128xf32, #tpu.memory_space<vmem>>, vector<512x128xf32>
    %c0_2 = arith.constant 0 : index
    %c0_3 = arith.constant 0 : index
    %4 = vector.load %arg3[%c0_2, %c0_3] : memref<512x128xbf16, #tpu.memory_space<vmem>>, vector<512x128xbf16>
    %c0_4 = arith.constant 0 : index
    %c0_5 = arith.constant 0 : index
    %5 = vector.load %arg4[%c0_4, %c0_5] : memref<128x128xbf16, #tpu.memory_space<vmem>>, vector<128x128xbf16>
    %cst = arith.constant dense<0.000000e+00> : vector<512x128xf32>
    %6 = tpu.matmul %4, %5, %cst {dimension_numbers = #tpu.dot_dimension_numbers<[1], [0], [0], [1], [0, 0, 1, 1], [], []>} : vector<512x128xbf16>, vector<128x128xbf16>, vector<512x128xf32> -> vector<512x128xf32>
    %7 = arith.addf %3, %6 : vector<512x128xf32>
    %c0_6 = arith.constant 0 : index
    %c0_7 = arith.constant 0 : index
    %8 = vector.load %arg8[%c0_6, %c0_7] : memref<512x128xf32, #tpu.memory_space<vmem>>, vector<512x128xf32>
    tpu.vector_store %arg8[%c0_6, %c0_7], %7 {strides = array<i32>} : memref<512x128xf32, #tpu.memory_space<vmem>>, vector<512x128xf32>,
    %c0_i32_8 = arith.constant 0 : i32
    %9 = arith.cmpi eq, %arg2, %c0_i32_8 : i32
    %10 = arith.extui %9 : i1 to i32
    %c0_i32_9 = arith.constant 0 : i32
    %11 = arith.cmpi ne, %10, %c0_i32_9 : i32
    scf.if %11 {
      %c0_10 = arith.constant 0 : index
      %c0_11 = arith.constant 0 : index
      %12 = vector.load %arg8[%c0_10, %c0_11] : memref<512x128xf32, #tpu.memory_space<vmem>>, vector<512x128xf32>
      %c0_12 = arith.constant 0 : index
      %c0_13 = arith.constant 0 : index
      %13 = vector.load %arg5[%c0_12, %c0_13] : memref<1x128xf32, #tpu.memory_space<vmem>>, vector<1x128xf32>
      %14 = vector.broadcast %13 : vector<1x128xf32> to vector<512x128xf32>
      %15 = arith.mulf %12, %14 : vector<512x128xf32>
      %c0_14 = arith.constant 0 : index
      %c0_15 = arith.constant 0 : index
      %16 = vector.load %arg6[%c0_14, %c0_15] : memref<1x128xf32, #tpu.memory_space<vmem>>, vector<1x128xf32>
      %17 = vector.broadcast %16 : vector<1x128xf32> to vector<512x128xf32>
      %18 = arith.addf %15, %17 : vector<512x128xf32>
      %cst_16 = arith.constant 2.000000e+01 : f32
      %19 = vector.broadcast %cst_16 : f32 to vector<512x128xf32>
      %20 = arith.minimumf %18, %19 : vector<512x128xf32>
      %21 = math.exp %20 : vector<512x128xf32>
      %cst_17 = arith.constant 2.000000e+00 : f32
      %22 = vector.broadcast %cst_17 : f32 to vector<512x128xf32>
      %23 = arith.addf %21, %22 : vector<512x128xf32>
      %24 = arith.mulf %21, %23 : vector<512x128xf32>
      %25 = arith.mulf %18, %24 : vector<512x128xf32>
      %cst_18 = arith.constant 2.000000e+00 : f32
      %26 = vector.broadcast %cst_18 : f32 to vector<512x128xf32>
      %27 = arith.addf %24, %26 : vector<512x128xf32>
      %28 = tpu.reciprocal %27 {approx = true} : vector<512x128xf32> -> vector<512x128xf32>
      %29 = arith.mulf %25, %28 : vector<512x128xf32>
      %30 = arith.truncf %29 : vector<512x128xf32> to vector<512x128xbf16>
      %c0_19 = arith.constant 0 : index
      %c0_20 = arith.constant 0 : index
      %31 = vector.load %arg7[%c0_19, %c0_20] : memref<512x128xbf16, #tpu.memory_space<vmem>>, vector<512x128xbf16>
      tpu.vector_store %arg7[%c0_19, %c0_20], %30 {strides = array<i32>} : memref<512x128xbf16, #tpu.memory_space<vmem>>, vector<512x128xbf16>,
    } else {
    }
    return
  }
  func.func @transform_0(%arg0: i32, %arg1: i32, %arg2: i32) -> (i32, i32) {
    %c0_i32 = arith.constant 0 : i32
    return %arg0, %arg2 : i32, i32
  }
  func.func @transform_1(%arg0: i32, %arg1: i32, %arg2: i32) -> (i32, i32) {
    %c0_i32 = arith.constant 0 : i32
    return %arg2, %arg1 : i32, i32
  }
  func.func @transform_2(%arg0: i32, %arg1: i32, %arg2: i32) -> (i32, i32) {
    %c0_i32 = arith.constant 0 : i32
    %c0_i32_0 = arith.constant 0 : i32
    return %c0_i32, %arg1 : i32, i32
  }
  func.func @transform_3(%arg0: i32, %arg1: i32, %arg2: i32) -> (i32, i32) {
    %c0_i32 = arith.constant 0 : i32
    %c0_i32_0 = arith.constant 0 : i32
    return %c0_i32, %arg1 : i32, i32
  }
  func.func @transform_4(%arg0: i32, %arg1: i32, %arg2: i32) -> (i32, i32) {
    %c0_i32 = arith.constant 0 : i32
    return %arg0, %arg1 : i32, i32
  }
}

</mosaic_0001>

<llo_original>
// kernel: _conv_im2col.1
$region0: #{_conv_im2col.1}
  #allocation0 [shape = 'u32[]', space=smem, size = 0x4, offset = 0x4, fixed_abs, tag = 'smem constant byte address 0x4 - core index']
  #allocation1 [shape = 'u32[72,128]{1,0:T(1,128)}', space=vmem, size = 0x9000, scoped, tag = 'internal scratch']
  #allocation2 [shape = 'f32[512,128]{1,0:T(8,128)}', space=vmem, size = 0x40000, scoped, tag = 'scratch operand']
  %s0 = inlined_call_operand.vmem [shape: bf16[2048,128], index: 0, kind: input, shape index: {}]
  %s1 = inlined_call_operand.vmem [shape: bf16[128,128], index: 1, kind: input, shape index: {}]
  %s2 = inlined_call_operand.vmem [shape: f32[1,128], index: 2, kind: input, shape index: {}]
  %s3 = inlined_call_operand.vmem [shape: f32[1,128], index: 3, kind: input, shape index: {}]
  %s4 = inlined_call_operand.hbm [shape: bf16[2048,32], index: 4, kind: output, shape index: {}]
  %s5 = sld [smem:[#allocation0]]
  $region57: #{_conv_im2col.1} parent=0
    _
  %s7 = ssub.s32 1, %s5
  %s8 = scalar_select 0, %s7, %s5
  $region1: #{_conv_im2col.1} parent=0
    #allocation3 [shape = 'u8[262144]{0}', space=vmem, size = 0x40000, scoped, tag = 'output window, operand 0']
    #allocation4 [shape = 's32[2]{0}', space=sflag, size = 0x8, scoped, tag = 'scoped memory for _conv_im2col.1']
    %9 = vsyncpa [#allocation4], 0
    %s10 = scalar_lea.sflag [#allocation4], 1
    %11 = vsyncpa %s10, 0
    loop: start=0, step=1, limit=6
    $region2: #{_conv_im2col.1} parent=1 // loop_pre_header
      _
    $region3: #{_conv_im2col.1} parent=1 // loop_header
      %s13 = sphi 0, %s17
      %p14 = scmp.ge.s32.totalorder %s13, 6
      %s20 = sphi 0, %s39
      %s21 = sphi 0, %s35
      %s22 = sphi 0, %s31
      %s23 = sphi 0, %s20
      %s24 = sphi 0, %s21
      %s25 = sphi 0, %s22
      %s26 = sphi 0, %s23
      %s27 = sphi 0, %s24
      %s28 = sphi 0, %s25
      %s44 = sphi 0, %s46
      %s47 = sphi 0, %s44
      %s48 = sphi 0, %s47
      %s64 = sphi 0, %s48
      %s72 = sphi 0, %s74
      %s75 = sphi 0, %s72
      %s76 = sphi 0, %s75
      %s92 = sphi 0, %s76
      %s98 = sphi 0, %s100
      %s101 = sphi 0, %s98
      %s102 = sphi 0, %s101
      %s118 = sphi 0, %s102
      %s124 = sphi 0, %s126
      %s127 = sphi 0, %s124
      %s128 = sphi 0, %s127
      %s144 = sphi 0, %s128
      %s152 = sphi 0, %s154
      %s155 = sphi 0, %s152
      %s156 = sphi 0, %s155
      %s172 = sphi 0, %s156
    $region4: #{_conv_im2col.1} parent=1 // loop_header_branch
      %16 = sbr.rel (%p14) target = $region8
    $region5: #{_conv_im2col.1} parent=1 // loop_body
      %s18 = ssub.s32 %s13, 1
      %s19 = ssub.s32 %s13, 2
      %s29 = sadd.s32 1, %s22
      %p30 = scmp.ge.s32.totalorder %s29, 1
      %s31 = scalar_select %p30, 0, %s29
      %s32 = sadd.s32 1, %s21
      %s33 = scalar_select %p30, %s32, %s21
      %p34 = scmp.ge.s32.totalorder %s33, 1
      %s35 = scalar_select %p34, 0, %s33
      %s36 = sadd.s32 1, %s20
      %s37 = scalar_select %p34, %s36, %s20
      %p38 = scmp.ge.s32.totalorder %s37, 4
      %s39 = scalar_select %p38, 0, %s37
      %s40 = ssub.s32 %s20, %s39
      %s41 = ssub.s32 %s22, %s31
      %s42 = sor.u32 %s40, %s41
      %p43 = scmp.eq.s32.totalorder %s42, 0
      %s45 = sadd.s32 %s44, 1
      %s46 = scalar_select %p43, %s44, %s45
      %p49 = pneg %p43
      %p50 = scmp.eq.s32.totalorder %s13, 3
      %p51 = por %p49, %p50
      %p52 = scmp.ne.s32.totalorder %s44, %s47
      %p53 = scmp.eq.s32.totalorder %s13, 0
      %p54 = por %p52, %p53
      %p55 = scmp.ne.s32.totalorder %s44, %s47
      %p56 = scmp.eq.s32.totalorder %s18, 3
      %p57 = por %p55, %p56
      %p58 = scmp.ne.s32.totalorder %s47, %s48
      %p59 = scmp.eq.s32.totalorder %s18, 0
      %p60 = por %p58, %p59
      %p61 = scmp.ne.s32.totalorder %s47, %s48
      %p62 = scmp.eq.s32.totalorder %s19, 3
      %p63 = por %p61, %p62
      %p65 = scmp.ne.s32.totalorder %s48, %s64
      %p66 = scmp.eq.s32.totalorder %s19, 0
      %p67 = por %p65, %p66
      %s68 = ssub.s32 %s22, %s31
      %s69 = ssub.s32 %s21, %s35
      %s70 = sor.u32 %s68, %s69
      %p71 = scmp.eq.s32.totalorder %s70, 0
      %s73 = sadd.s32 %s72, 1
      %s74 = scalar_select %p71, %s72, %s73
      %p77 = pneg %p71
      %p78 = scmp.eq.s32.totalorder %s13, 3
      %p79 = por %p77, %p78
      %p80 = scmp.ne.s32.totalorder %s72, %s75
      %p81 = scmp.eq.s32.totalorder %s13, 0
      %p82 = por %p80, %p81
      %p83 = scmp.ne.s32.totalorder %s72, %s75
      %p84 = scmp.eq.s32.totalorder %s18, 3
      %p85 = por %p83, %p84
      %p86 = scmp.ne.s32.totalorder %s75, %s76
      %p87 = scmp.eq.s32.totalorder %s18, 0
      %p88 = por %p86, %p87
      %p89 = scmp.ne.s32.totalorder %s75, %s76
      %p90 = scmp.eq.s32.totalorder %s19, 3
      %p91 = por %p89, %p90
      %p93 = scmp.ne.s32.totalorder %s76, %s92
      %p94 = scmp.eq.s32.totalorder %s19, 0
      %p95 = por %p93, %p94
      %s96 = ssub.s32 %s21, %s35
      %p97 = scmp.eq.s32.totalorder %s96, 0
      %s99 = sadd.s32 %s98, 1
      %s100 = scalar_select %p97, %s98, %s99
      %p103 = pneg %p97
      %p104 = scmp.eq.s32.totalorder %s13, 3
      %p105 = por %p103, %p104
      %p106 = scmp.ne.s32.totalorder %s98, %s101
      %p107 = scmp.eq.s32.totalorder %s13, 0
      %p108 = por %p106, %p107
      %p109 = scmp.ne.s32.totalorder %s98, %s101
      %p110 = scmp.eq.s32.totalorder %s18, 3
      %p111 = por %p109, %p110
      %p112 = scmp.ne.s32.totalorder %s101, %s102
      %p113 = scmp.eq.s32.totalorder %s18, 0
      %p114 = por %p112, %p113
      %p115 = scmp.ne.s32.totalorder %s101, %s102
      %p116 = scmp.eq.s32.totalorder %s19, 3
      %p117 = por %p115, %p116
      %p119 = scmp.ne.s32.totalorder %s102, %s118
      %p120 = scmp.eq.s32.totalorder %s19, 0
      %p121 = por %p119, %p120
      %s122 = ssub.s32 %s21, %s35
      %p123 = scmp.eq.s32.totalorder %s122, 0
      %s125 = sadd.s32 %s124, 1
      %s126 = scalar_select %p123, %s124, %s125
      %p129 = pneg %p123
      %p130 = scmp.eq.s32.totalorder %s13, 3
      %p131 = por %p129, %p130
      %p132 = scmp.ne.s32.totalorder %s124, %s127
      %p133 = scmp.eq.s32.totalorder %s13, 0
      %p134 = por %p132, %p133
      %p135 = scmp.ne.s32.totalorder %s124, %s127
      %p136 = scmp.eq.s32.totalorder %s18, 3
      %p137 = por %p135, %p136
      %p138 = scmp.ne.s32.totalorder %s127, %s128
      %p139 = scmp.eq.s32.totalorder %s18, 0
      %p140 = por %p138, %p139
      %p141 = scmp.ne.s32.totalorder %s127, %s128
      %p142 = scmp.eq.s32.totalorder %s19, 3
      %p143 = por %p141, %p142
      %p145 = scmp.ne.s32.totalorder %s128, %s144
      %p146 = scmp.eq.s32.totalorder %s19, 0
      %p147 = por %p145, %p146
      %s148 = ssub.s32 %s20, %s39
      %s149 = ssub.s32 %s21, %s35
      %s150 = sor.u32 %s148, %s149
      %p151 = scmp.eq.s32.totalorder %s150, 0
      %s153 = sadd.s32 %s152, 1
      %s154 = scalar_select %p151, %s152, %s153
      %p157 = pneg %p151
      %p158 = scmp.eq.s32.totalorder %s13, 3
      %p159 = por %p157, %p158
      %p160 = scmp.ne.s32.totalorder %s152, %s155
      %p161 = scmp.eq.s32.totalorder %s13, 0
      %p162 = por %p160, %p161
      %p163 = scmp.ne.s32.totalorder %s152, %s155
      %p164 = scmp.eq.s32.totalorder %s18, 3
      %p165 = por %p163, %p164
      %p166 = scmp.ne.s32.totalorder %s155, %s156
      %p167 = scmp.eq.s32.totalorder %s18, 0
      %p168 = por %p166, %p167
      %p169 = scmp.ne.s32.totalorder %s155, %s156
      %p170 = scmp.eq.s32.totalorder %s19, 3
      %p171 = por %p169, %p170
      %p173 = scmp.ne.s32.totalorder %s156, %s172
      %p174 = scmp.eq.s32.totalorder %s19, 0
      %p175 = por %p173, %p174
      %p176 = scmp.le.s32.totalorder 1, %s13
      %p177 = scmp.lt.s32.totalorder %s13, 5
      %p178 = pnand %p176, %p177
      %p179 = pneg %p178
      // Predicated region
      $region9: #{_conv_im2col.1} parent=5 // pred_check
        _
      $region10: #{_conv_im2col.1} parent=5 // pred_check_branch
        %181 = sbr.rel (%p178) target = $region12
      $region11: #{_conv_im2col.1} parent=5 // pred_region
        %s182 = ssub.s32 %s13, 1
        // Predicated region
        $region13: #{_conv_im2col.1} parent=11 // pred_check
          %p183 = pneg %p88
        $region14: #{_conv_im2col.1} parent=11 // pred_check_branch
          %185 = sbr.rel (%p183) target = $region16
        $region15: #{_conv_im2col.1} parent=11 // pred_region
          %s186 = smul.u32 16, %s25
          %p187 = scmp.lt.s32.totalorder %s186, 15
          %s188 = scalar_select %p187, %s186, 15
          %p189 = scmp.lt.s32.totalorder %s24, 0
          %s190 = scalar_select %p189, %s24, 0
          %s191 = sadd.s32 %s190, %s188
          %s192 = smul.addr %s191, 4
          %s193 = scalar_lea.vmem %s1, %s192
          %s194 = smul.u32 16, %s25
        $region16: #{_conv_im2col.1} parent=11 // pred_fallthru
          _
        // Predicated region
        $region17: #{_conv_im2col.1} parent=11 // pred_check
          %p195 = pneg %p114
        $region18: #{_conv_im2col.1} parent=11 // pred_check_branch
          %197 = sbr.rel (%p195) target = $region20
        $region19: #{_conv_im2col.1} parent=11 // pred_region
          %p198 = scmp.lt.s32.totalorder %s24, 0
          %s199 = scalar_select %p198, %s24, 0
          %s200 = scalar_lea.vmem %s2, %s199
        $region20: #{_conv_im2col.1} parent=11 // pred_fallthru
          _
        // Predicated region
        $region21: #{_conv_im2col.1} parent=11 // pred_check
          %p201 = pneg %p140
        $region22: #{_conv_im2col.1} parent=11 // pred_check_branch
          %203 = sbr.rel (%p201) target = $region24
        $region23: #{_conv_im2col.1} parent=11 // pred_region
          %p204 = scmp.lt.s32.totalorder %s24, 0
          %s205 = scalar_select %p204, %s24, 0
          %s206 = scalar_lea.vmem %s3, %s205
        $region24: #{_conv_im2col.1} parent=11 // pred_fallthru
          _
      $region12: #{_conv_im2col.1} parent=5 // pred_fallthru
        _
      %p207 = scmp.lt.s32.totalorder %s13, 4
      // Predicated region
      $region25: #{_conv_im2col.1} parent=5 // pred_check
        %p208 = pneg %p207
      $region26: #{_conv_im2col.1} parent=5 // pred_check_branch
        %210 = sbr.rel (%p208) target = $region28
      $region27: #{_conv_im2col.1} parent=5 // pred_region
        // Predicated region
        $region29: #{_conv_im2col.1} parent=27 // pred_check
          %p211 = pneg %p54
        $region30: #{_conv_im2col.1} parent=27 // pred_check_branch
          %213 = sbr.rel (%p211) target = $region32
        $region31: #{_conv_im2col.1} parent=27 // pred_region
          %s214 = smul.u32 64, %s20
          %p215 = scmp.lt.s32.totalorder %s214, 255
          %s216 = scalar_select %p215, %s214, 255
          %p217 = scmp.lt.s32.totalorder %s22, 0
          %s218 = scalar_select %p217, %s22, 0
          %s219 = sadd.s32 %s218, %s216
          %s220 = smul.addr %s219, 4
          %s221 = scalar_lea.vmem %s0, %s220
          %s222 = smul.u32 64, %s20
        $region32: #{_conv_im2col.1} parent=27 // pred_fallthru
          _
      $region28: #{_conv_im2col.1} parent=5 // pred_fallthru
        _
      %p223 = scmp.le.s32.totalorder 1, %s13
      %p224 = scmp.lt.s32.totalorder %s13, 5
      %p225 = pnand %p223, %p224
      %p226 = pneg %p225
      // Predicated region
      $region33: #{_conv_im2col.1} parent=5 // pred_check
        _
      $region34: #{_conv_im2col.1} parent=5 // pred_check_branch
        %228 = sbr.rel (%p225) target = $region36
      $region35: #{_conv_im2col.1} parent=5 // pred_region
        %s229 = ssub.s32 %s13, 1
        %s230 = smul.u32 64, %s23
        %p231 = scmp.lt.s32.totalorder %s230, 255
        %s232 = scalar_select %p231, %s230, 255
        %p233 = scmp.lt.s32.totalorder %s25, 0
        %s234 = scalar_select %p233, %s25, 0
        %s235 = sadd.s32 %s234, %s232
        %s236 = smul.addr %s235, 4
        %s237 = scalar_lea.vmem %s0, %s236
        %p238 = pneg %p60
        %p239 = pneg %p57
        %s240 = smul.u32 16, %s25
        %p241 = scmp.lt.s32.totalorder %s240, 15
        %s242 = scalar_select %p241, %s240, 15
        %p243 = scmp.lt.s32.totalorder %s24, 0
        %s244 = scalar_select %p243, %s24, 0
        %s245 = sadd.s32 %s244, %s242
        %s246 = smul.addr %s245, 4
        %s247 = scalar_lea.vmem %s1, %s246
        %p248 = pneg %p88
        %p249 = pneg %p85
        %p250 = scmp.lt.s32.totalorder %s24, 0
        %s251 = scalar_select %p250, %s24, 0
        %s252 = scalar_lea.vmem %s2, %s251
        %p253 = pneg %p114
        %p254 = pneg %p111
        %p255 = scmp.lt.s32.totalorder %s24, 0
        %s256 = scalar_select %p255, %s24, 0
        %s257 = scalar_lea.vmem %s3, %s256
        %p258 = pneg %p140
        %p259 = pneg %p137
        %p260 = pneg %p168
        %p261 = pneg %p165
        %s262 = sand.u32 %s155, 1
        %s263 = scalar_lea.sflag [#allocation4], %s262
        %s264 = sand.u32 %s155, 1
        %s265 = smul.addr %s264, 256
        %s266 = scalar_lea.vmem [#allocation3], %s265
        %s267 = smul.u32 64, %s23
        %p268 = scmp.lt.s32.totalorder %s267, 255
        %s269 = scalar_select %p268, %s267, 255
        %p270 = scmp.lt.s32.totalorder %s25, 0
        %s271 = scalar_select %p270, %s25, 0
        %s272 = sadd.s32 %s271, %s269
        %s273 = smul.addr %s272, 4
        %s274 = scalar_lea.vmem %s0, %s273
        %s275 = smul.u32 64, %s23
        %s276 = smul.u32 16, %s25
        %p277 = scmp.lt.s32.totalorder %s276, 15
        %s278 = scalar_select %p277, %s276, 15
        %p279 = scmp.lt.s32.totalorder %s24, 0
        %s280 = scalar_select %p279, %s24, 0
        %s281 = sadd.s32 %s280, %s278
        %s282 = smul.addr %s281, 4
        %s283 = scalar_lea.vmem %s1, %s282
        %s284 = smul.u32 16, %s25
        %p285 = scmp.lt.s32.totalorder %s24, 0
        %s286 = scalar_select %p285, %s24, 0
        %s287 = scalar_lea.vmem %s2, %s286
        %p288 = scmp.lt.s32.totalorder %s24, 0
        %s289 = scalar_select %p288, %s24, 0
        %s290 = scalar_lea.vmem %s3, %s289
        %s291 = smul.u32 64, %s23
        %p292 = scmp.eq.s32.totalorder %s25, 0
        // Predicated region
        $region37: #{_conv_im2col.1} parent=35 // pred_check
          %p293 = pneg %p292
        $region38: #{_conv_im2col.1} parent=35 // pred_check_branch
          %295 = sbr.rel (%p293) target = $region40
        $region39: #{_conv_im2col.1} parent=35 // pred_region
          %296 = vst [vmem:[#allocation2] sm:$0xff] 0.0
          %297 = vst [vmem:[#allocation2 + $0x8] sm:$0xff] 0.0
          %298 = vst [vmem:[#allocation2 + $0x10] sm:$0xff] 0.0
          %299 = vst [vmem:[#allocation2 + $0x18] sm:$0xff] 0.0
          %300 = vst [vmem:[#allocation2 + $0x20] sm:$0xff] 0.0
          %301 = vst [vmem:[#allocation2 + $0x28] sm:$0xff] 0.0
          %302 = vst [vmem:[#allocation2 + $0x30] sm:$0xff] 0.0
          %303 = vst [vmem:[#allocation2 + $0x38] sm:$0xff] 0.0
          %304 = vst [vmem:[#allocation2 + $0x40] sm:$0xff] 0.0
          %305 = vst [vmem:[#allocation2 + $0x48] sm:$0xff] 0.0
          %306 = vst [vmem:[#allocation2 + $0x50] sm:$0xff] 0.0
          %307 = vst [vmem:[#allocation2 + $0x58] sm:$0xff] 0.0
          %308 = vst [vmem:[#allocation2 + $0x60] sm:$0xff] 0.0
          %309 = vst [vmem:[#allocation2 + $0x68] sm:$0xff] 0.0
          %310 = vst [vmem:[#allocation2 + $0x70] sm:$0xff] 0.0
          %311 = vst [vmem:[#allocation2 + $0x78] sm:$0xff] 0.0
          %312 = vst [vmem:[#allocation2 + $0x80] sm:$0xff] 0.0
          %313 = vst [vmem:[#allocation2 + $0x88] sm:$0xff] 0.0
          %314 = vst [vmem:[#allocation2 + $0x90] sm:$0xff] 0.0
          %315 = vst [vmem:[#allocation2 + $0x98] sm:$0xff] 0.0
          %316 = vst [vmem:[#allocation2 + $0xa0] sm:$0xff] 0.0
          %317 = vst [vmem:[#allocation2 + $0xa8] sm:$0xff] 0.0
          %318 = vst [vmem:[#allocation2 + $0xb0] sm:$0xff] 0.0
          %319 = vst [vmem:[#allocation2 + $0xb8] sm:$0xff] 0.0
          %320 = vst [vmem:[#allocation2 + $0xc0] sm:$0xff] 0.0
          %321 = vst [vmem:[#allocation2 + $0xc8] sm:$0xff] 0.0
          %322 = vst [vmem:[#allocation2 + $0xd0] sm:$0xff] 0.0
          %323 = vst [vmem:[#allocation2 + $0xd8] sm:$0xff] 0.0
          %324 = vst [vmem:[#allocation2 + $0xe0] sm:$0xff] 0.0
          %325 = vst [vmem:[#allocation2 + $0xe8] sm:$0xff] 0.0
          %326 = vst [vmem:[#allocation2 + $0xf0] sm:$0xff] 0.0
          %327 = vst [vmem:[#allocation2 + $0xf8] sm:$0xff] 0.0
          %328 = vst [vmem:[#allocation2 + $0x100] sm:$0xff] 0.0
          %329 = vst [vmem:[#allocation2 + $0x108] sm:$0xff] 0.0
          %330 = vst [vmem:[#allocation2 + $0x110] sm:$0xff] 0.0
          %331 = vst [vmem:[#allocation2 + $0x118] sm:$0xff] 0.0
          %332 = vst [vmem:[#allocation2 + $0x120] sm:$0xff] 0.0
          %333 = vst [vmem:[#allocation2 + $0x128] sm:$0xff] 0.0
          %334 = vst [vmem:[#allocation2 + $0x130] sm:$0xff] 0.0
          %335 = vst [vmem:[#allocation2 + $0x138] sm:$0xff] 0.0
          %336 = vst [vmem:[#allocation2 + $0x140] sm:$0xff] 0.0
          %337 = vst [vmem:[#allocation2 + $0x148] sm:$0xff] 0.0
          %338 = vst [vmem:[#allocation2 + $0x150] sm:$0xff] 0.0
          %339 = vst [vmem:[#allocation2 + $0x158] sm:$0xff] 0.0
          %340 = vst [vmem:[#allocation2 + $0x160] sm:$0xff] 0.0
          %341 = vst [vmem:[#allocation2 + $0x168] sm:$0xff] 0.0
          %342 = vst [vmem:[#allocation2 + $0x170] sm:$0xff] 0.0
          %343 = vst [vmem:[#allocation2 + $0x178] sm:$0xff] 0.0
          %344 = vst [vmem:[#allocation2 + $0x180] sm:$0xff] 0.0
          %345 = vst [vmem:[#allocation2 + $0x188] sm:$0xff] 0.0
          %346 = vst [vmem:[#allocation2 + $0x190] sm:$0xff] 0.0
          %347 = vst [vmem:[#allocation2 + $0x198] sm:$0xff] 0.0
          %348 = vst [vmem:[#allocation2 + $0x1a0] sm:$0xff] 0.0
          %349 = vst [vmem:[#allocation2 + $0x1a8] sm:$0xff] 0.0
          %350 = vst [vmem:[#allocation2 + $0x1b0] sm:$0xff] 0.0
          %351 = vst [vmem:[#allocation2 + $0x1b8] sm:$0xff] 0.0
          %352 = vst [vmem:[#allocation2 + $0x1c0] sm:$0xff] 0.0
          %353 = vst [vmem:[#allocation2 + $0x1c8] sm:$0xff] 0.0
          %354 = vst [vmem:[#allocation2 + $0x1d0] sm:$0xff] 0.0
          %355 = vst [vmem:[#allocation2 + $0x1d8] sm:$0xff] 0.0
          %356 = vst [vmem:[#allocation2 + $0x1e0] sm:$0xff] 0.0
          %357 = vst [vmem:[#allocation2 + $0x1e8] sm:$0xff] 0.0
          %358 = vst [vmem:[#allocation2 + $0x1f0] sm:$0xff] 0.0
          %359 = vst [vmem:[#allocation2 + $0x1f8] sm:$0xff] 0.0
        $region40: #{_conv_im2col.1} parent=35 // pred_fallthru
          _
        %v360 = vld [vmem:[#allocation2] sm:$0xff]
        %v361 = vld [vmem:[#allocation2 + $0x8] sm:$0xff]
        %v362 = vld [vmem:[#allocation2 + $0x10] sm:$0xff]
        %v363 = vld [vmem:[#allocation2 + $0x18] sm:$0xff]
        %v364 = vld [vmem:[#allocation2 + $0x20] sm:$0xff]
        %v365 = vld [vmem:[#allocation2 + $0x28] sm:$0xff]
        %v366 = vld [vmem:[#allocation2 + $0x30] sm:$0xff]
        %v367 = vld [vmem:[#allocation2 + $0x38] sm:$0xff]
        %v368 = vld [vmem:[#allocation2 + $0x40] sm:$0xff]
        %v369 = vld [vmem:[#allocation2 + $0x48] sm:$0xff]
        %v370 = vld [vmem:[#allocation2 + $0x50] sm:$0xff]
        %v371 = vld [vmem:[#allocation2 + $0x58] sm:$0xff]
        %v372 = vld [vmem:[#allocation2 + $0x60] sm:$0xff]
        %v373 = vld [vmem:[#allocation2 + $0x68] sm:$0xff]
        %v374 = vld [vmem:[#allocation2 + $0x70] sm:$0xff]
        %v375 = vld [vmem:[#allocation2 + $0x78] sm:$0xff]
        %v376 = vld [vmem:[#allocation2 + $0x80] sm:$0xff]
        %v377 = vld [vmem:[#allocation2 + $0x88] sm:$0xff]
        %v378 = vld [vmem:[#allocation2 + $0x90] sm:$0xff]
        %v379 = vld [vmem:[#allocation2 + $0x98] sm:$0xff]
        %v380 = vld [vmem:[#allocation2 + $0xa0] sm:$0xff]
        %v381 = vld [vmem:[#allocation2 + $0xa8] sm:$0xff]
        %v382 = vld [vmem:[#allocation2 + $0xb0] sm:$0xff]
        %v383 = vld [vmem:[#allocation2 + $0xb8] sm:$0xff]
        %v384 = vld [vmem:[#allocation2 + $0xc0] sm:$0xff]
        %v385 = vld [vmem:[#allocation2 + $0xc8] sm:$0xff]
        %v386 = vld [vmem:[#allocation2 + $0xd0] sm:$0xff]
        %v387 = vld [vmem:[#allocation2 + $0xd8] sm:$0xff]
        %v388 = vld [vmem:[#allocation2 + $0xe0] sm:$0xff]
        %v389 = vld [vmem:[#allocation2 + $0xe8] sm:$0xff]
        %v390 = vld [vmem:[#allocation2 + $0xf0] sm:$0xff]
        %v391 = vld [vmem:[#allocation2 + $0xf8] sm:$0xff]
        %v392 = vld [vmem:[#allocation2 + $0x100] sm:$0xff]
        %v393 = vld [vmem:[#allocation2 + $0x108] sm:$0xff]
        %v394 = vld [vmem:[#allocation2 + $0x110] sm:$0xff]
        %v395 = vld [vmem:[#allocation2 + $0x118] sm:$0xff]
        %v396 = vld [vmem:[#allocation2 + $0x120] sm:$0xff]
        %v397 = vld [vmem:[#allocation2 + $0x128] sm:$0xff]
        %v398 = vld [vmem:[#allocation2 + $0x130] sm:$0xff]
        %v399 = vld [vmem:[#allocation2 + $0x138] sm:$0xff]
        %v400 = vld [vmem:[#allocation2 + $0x140] sm:$0xff]
        %v401 = vld [vmem:[#allocation2 + $0x148] sm:$0xff]
        %v402 = vld [vmem:[#allocation2 + $0x150] sm:$0xff]
        %v403 = vld [vmem:[#allocation2 + $0x158] sm:$0xff]
        %v404 = vld [vmem:[#allocation2 + $0x160] sm:$0xff]
        %v405 = vld [vmem:[#allocation2 + $0x168] sm:$0xff]
        %v406 = vld [vmem:[#allocation2 + $0x170] sm:$0xff]
        %v407 = vld [vmem:[#allocation2 + $0x178] sm:$0xff]
        %v408 = vld [vmem:[#allocation2 + $0x180] sm:$0xff]
        %v409 = vld [vmem:[#allocation2 + $0x188] sm:$0xff]
        %v410 = vld [vmem:[#allocation2 + $0x190] sm:$0xff]
        %v411 = vld [vmem:[#allocation2 + $0x198] sm:$0xff]
        %v412 = vld [vmem:[#allocation2 + $0x1a0] sm:$0xff]
        %v413 = vld [vmem:[#allocation2 + $0x1a8] sm:$0xff]
        %v414 = vld [vmem:[#allocation2 + $0x1b0] sm:$0xff]
        %v415 = vld [vmem:[#allocation2 + $0x1b8] sm:$0xff]
        %v416 = vld [vmem:[#allocation2 + $0x1c0] sm:$0xff]
        %v417 = vld [vmem:[#allocation2 + $0x1c8] sm:$0xff]
        %v418 = vld [vmem:[#allocation2 + $0x1d0] sm:$0xff]
        %v419 = vld [vmem:[#allocation2 + $0x1d8] sm:$0xff]
        %v420 = vld [vmem:[#allocation2 + $0x1e0] sm:$0xff]
        %v421 = vld [vmem:[#allocation2 + $0x1e8] sm:$0xff]
        %v422 = vld [vmem:[#allocation2 + $0x1f0] sm:$0xff]
        %v423 = vld [vmem:[#allocation2 + $0x1f8] sm:$0xff]
        %v424 = vld [vmem:[%s274] sm:$0xf]
        %v425 = vld [vmem:[%s274 + $0x4] sm:$0xf]
        %v426 = vld [vmem:[%s274 + $0x8] sm:$0xf]
        %v427 = vld [vmem:[%s274 + $0xc] sm:$0xf]
        %v428 = vld [vmem:[%s274 + $0x10] sm:$0xf]
        %v429 = vld [vmem:[%s274 + $0x14] sm:$0xf]
        %v430 = vld [vmem:[%s274 + $0x18] sm:$0xf]
        %v431 = vld [vmem:[%s274 + $0x1c] sm:$0xf]
        %v432 = vld [vmem:[%s274 + $0x20] sm:$0xf]
        %v433 = vld [vmem:[%s274 + $0x24] sm:$0xf]
        %v434 = vld [vmem:[%s274 + $0x28] sm:$0xf]
        %v435 = vld [vmem:[%s274 + $0x2c] sm:$0xf]
        %v436 = vld [vmem:[%s274 + $0x30] sm:$0xf]
        %v437 = vld [vmem:[%s274 + $0x34] sm:$0xf]
        %v438 = vld [vmem:[%s274 + $0x38] sm:$0xf]
        %v439 = vld [vmem:[%s274 + $0x3c] sm:$0xf]
        %v440 = vld [vmem:[%s274 + $0x40] sm:$0xf]
        %v441 = vld [vmem:[%s274 + $0x44] sm:$0xf]
        %v442 = vld [vmem:[%s274 + $0x48] sm:$0xf]
        %v443 = vld [vmem:[%s274 + $0x4c] sm:$0xf]
        %v444 = vld [vmem:[%s274 + $0x50] sm:$0xf]
        %v445 = vld [vmem:[%s274 + $0x54] sm:$0xf]
        %v446 = vld [vmem:[%s274 + $0x58] sm:$0xf]
        %v447 = vld [vmem:[%s274 + $0x5c] sm:$0xf]
        %v448 = vld [vmem:[%s274 + $0x60] sm:$0xf]
        %v449 = vld [vmem:[%s274 + $0x64] sm:$0xf]
        %v450 = vld [vmem:[%s274 + $0x68] sm:$0xf]
        %v451 = vld [vmem:[%s274 + $0x6c] sm:$0xf]
        %v452 = vld [vmem:[%s274 + $0x70] sm:$0xf]
        %v453 = vld [vmem:[%s274 + $0x74] sm:$0xf]
        %v454 = vld [vmem:[%s274 + $0x78] sm:$0xf]
        %v455 = vld [vmem:[%s274 + $0x7c] sm:$0xf]
        %v456 = vld [vmem:[%s274 + $0x80] sm:$0xf]
        %v457 = vld [vmem:[%s274 + $0x84] sm:$0xf]
        %v458 = vld [vmem:[%s274 + $0x88] sm:$0xf]
        %v459 = vld [vmem:[%s274 + $0x8c] sm:$0xf]
        %v460 = vld [vmem:[%s274 + $0x90] sm:$0xf]
        %v461 = vld [vmem:[%s274 + $0x94] sm:$0xf]
        %v462 = vld [vmem:[%s274 + $0x98] sm:$0xf]
        %v463 = vld [vmem:[%s274 + $0x9c] sm:$0xf]
        %v464 = vld [vmem:[%s274 + $0xa0] sm:$0xf]
        %v465 = vld [vmem:[%s274 + $0xa4] sm:$0xf]
        %v466 = vld [vmem:[%s274 + $0xa8] sm:$0xf]
        %v467 = vld [vmem:[%s274 + $0xac] sm:$0xf]
        %v468 = vld [vmem:[%s274 + $0xb0] sm:$0xf]
        %v469 = vld [vmem:[%s274 + $0xb4] sm:$0xf]
        %v470 = vld [vmem:[%s274 + $0xb8] sm:$0xf]
        %v471 = vld [vmem:[%s274 + $0xbc] sm:$0xf]
        %v472 = vld [vmem:[%s274 + $0xc0] sm:$0xf]
        %v473 = vld [vmem:[%s274 + $0xc4] sm:$0xf]
        %v474 = vld [vmem:[%s274 + $0xc8] sm:$0xf]
        %v475 = vld [vmem:[%s274 + $0xcc] sm:$0xf]
        %v476 = vld [vmem:[%s274 + $0xd0] sm:$0xf]
        %v477 = vld [vmem:[%s274 + $0xd4] sm:$0xf]
        %v478 = vld [vmem:[%s274 + $0xd8] sm:$0xf]
        %v479 = vld [vmem:[%s274 + $0xdc] sm:$0xf]
        %v480 = vld [vmem:[%s274 + $0xe0] sm:$0xf]
        %v481 = vld [vmem:[%s274 + $0xe4] sm:$0xf]
        %v482 = vld [vmem:[%s274 + $0xe8] sm:$0xf]
        %v483 = vld [vmem:[%s274 + $0xec] sm:$0xf]
        %v484 = vld [vmem:[%s274 + $0xf0] sm:$0xf]
        %v485 = vld [vmem:[%s274 + $0xf4] sm:$0xf]
        %v486 = vld [vmem:[%s274 + $0xf8] sm:$0xf]
        %v487 = vld [vmem:[%s274 + $0xfc] sm:$0xf]
        %v488 = vld [vmem:[%s283] sm:$0xf]
        %v489 = vld [vmem:[%s283 + $0x4] sm:$0xf]
        %v490 = vld [vmem:[%s283 + $0x8] sm:$0xf]
        %v491 = vld [vmem:[%s283 + $0xc] sm:$0xf]
        %v492 = vld [vmem:[%s283 + $0x10] sm:$0xf]
        %v493 = vld [vmem:[%s283 + $0x14] sm:$0xf]
        %v494 = vld [vmem:[%s283 + $0x18] sm:$0xf]
        %v495 = vld [vmem:[%s283 + $0x1c] sm:$0xf]
        %v496 = vld [vmem:[%s283 + $0x20] sm:$0xf]
        %v497 = vld [vmem:[%s283 + $0x24] sm:$0xf]
        %v498 = vld [vmem:[%s283 + $0x28] sm:$0xf]
        %v499 = vld [vmem:[%s283 + $0x2c] sm:$0xf]
        %v500 = vld [vmem:[%s283 + $0x30] sm:$0xf]
        %v501 = vld [vmem:[%s283 + $0x34] sm:$0xf]
        %v502 = vld [vmem:[%s283 + $0x38] sm:$0xf]
        %v503 = vld [vmem:[%s283 + $0x3c] sm:$0xf]
        %v568 = vunpack.c.l.b16 %v424
        %v569 = vunpack.c.l.b16 %v425
        %v570 = vunpack.c.l.b16 %v426
        %v571 = vunpack.c.l.b16 %v427
        %v572 = vunpack.c.l.b16 %v428
        %v573 = vunpack.c.l.b16 %v429
        %v574 = vunpack.c.l.b16 %v430
        %v575 = vunpack.c.l.b16 %v431
        %v576 = vunpack.c.l.b16 %v432
        %v577 = vunpack.c.l.b16 %v433
        %v578 = vunpack.c.l.b16 %v434
        %v579 = vunpack.c.l.b16 %v435
        %v580 = vunpack.c.l.b16 %v436
        %v581 = vunpack.c.l.b16 %v437
        %v582 = vunpack.c.l.b16 %v438
        %v583 = vunpack.c.l.b16 %v439
        %v584 = vunpack.c.l.b16 %v440
        %v585 = vunpack.c.l.b16 %v441
        %v586 = vunpack.c.l.b16 %v442
        %v587 = vunpack.c.l.b16 %v443
        %v588 = vunpack.c.l.b16 %v444
        %v589 = vunpack.c.l.b16 %v445
        %v590 = vunpack.c.l.b16 %v446
        %v591 = vunpack.c.l.b16 %v447
        %v592 = vunpack.c.l.b16 %v448
        %v593 = vunpack.c.l.b16 %v449
        %v594 = vunpack.c.l.b16 %v450
        %v595 = vunpack.c.l.b16 %v451
        %v596 = vunpack.c.l.b16 %v452
        %v597 = vunpack.c.l.b16 %v453
        %v598 = vunpack.c.l.b16 %v454
        %v599 = vunpack.c.l.b16 %v455
        %v600 = vunpack.c.l.b16 %v456
        %v601 = vunpack.c.l.b16 %v457
        %v602 = vunpack.c.l.b16 %v458
        %v603 = vunpack.c.l.b16 %v459
        %v604 = vunpack.c.l.b16 %v460
        %v605 = vunpack.c.l.b16 %v461
        %v606 = vunpack.c.l.b16 %v462
        %v607 = vunpack.c.l.b16 %v463
        %v608 = vunpack.c.l.b16 %v464
        %v609 = vunpack.c.l.b16 %v465
        %v610 = vunpack.c.l.b16 %v466
        %v611 = vunpack.c.l.b16 %v467
        %v612 = vunpack.c.l.b16 %v468
        %v613 = vunpack.c.l.b16 %v469
        %v614 = vunpack.c.l.b16 %v470
        %v615 = vunpack.c.l.b16 %v471
        %v616 = vunpack.c.l.b16 %v472
        %v617 = vunpack.c.l.b16 %v473
        %v618 = vunpack.c.l.b16 %v474
        %v619 = vunpack.c.l.b16 %v475
        %v620 = vunpack.c.l.b16 %v476
        %v621 = vunpack.c.l.b16 %v477
        %v622 = vunpack.c.l.b16 %v478
        %v623 = vunpack.c.l.b16 %v479
        %v624 = vunpack.c.l.b16 %v480
        %v625 = vunpack.c.l.b16 %v481
        %v626 = vunpack.c.l.b16 %v482
        %v627 = vunpack.c.l.b16 %v483
        %v628 = vunpack.c.l.b16 %v484
        %v629 = vunpack.c.l.b16 %v485
        %v630 = vunpack.c.l.b16 %v486
        %v631 = vunpack.c.l.b16 %v487
        %v632 = vpack.c.b16 %v569, %v568
        %v633 = vpack.c.b16 %v571, %v570
        %v634 = vpack.c.b16 %v573, %v572
        %v635 = vpack.c.b16 %v575, %v574
        %v636 = vpack.c.b16 %v577, %v576
        %v637 = vpack.c.b16 %v579, %v578
        %v638 = vpack.c.b16 %v581, %v580
        %v639 = vpack.c.b16 %v583, %v582
        %v640 = vpack.c.b16 %v585, %v584
        %v641 = vpack.c.b16 %v587, %v586
        %v642 = vpack.c.b16 %v589, %v588
        %v643 = vpack.c.b16 %v591, %v590
        %v644 = vpack.c.b16 %v593, %v592
        %v645 = vpack.c.b16 %v595, %v594
        %v646 = vpack.c.b16 %v597, %v596
        %v647 = vpack.c.b16 %v599, %v598
        %v648 = vpack.c.b16 %v601, %v600
        %v649 = vpack.c.b16 %v603, %v602
        %v650 = vpack.c.b16 %v605, %v604
        %v651 = vpack.c.b16 %v607, %v606
        %v652 = vpack.c.b16 %v609, %v608
        %v653 = vpack.c.b16 %v611, %v610
        %v654 = vpack.c.b16 %v613, %v612
        %v655 = vpack.c.b16 %v615, %v614
        %v656 = vpack.c.b16 %v617, %v616
        %v657 = vpack.c.b16 %v619, %v618
        %v658 = vpack.c.b16 %v621, %v620
        %v659 = vpack.c.b16 %v623, %v622
        %v660 = vpack.c.b16 %v625, %v624
        %v661 = vpack.c.b16 %v627, %v626
        %v662 = vpack.c.b16 %v629, %v628
        %v663 = vpack.c.b16 %v631, %v630
        %v712 = vunpack.c.l.b16 %v488
        %v713 = vunpack.c.l.b16 %v489
        %v714 = vunpack.c.l.b16 %v490
        %v715 = vunpack.c.l.b16 %v491
        %v716 = vunpack.c.l.b16 %v492
        %v717 = vunpack.c.l.b16 %v493
        %v718 = vunpack.c.l.b16 %v494
        %v719 = vunpack.c.l.b16 %v495
        %v720 = vunpack.c.l.b16 %v496
        %v721 = vunpack.c.l.b16 %v497
        %v722 = vunpack.c.l.b16 %v498
        %v723 = vunpack.c.l.b16 %v499
        %v724 = vunpack.c.l.b16 %v500
        %v725 = vunpack.c.l.b16 %v501
        %v726 = vunpack.c.l.b16 %v502
        %v727 = vunpack.c.l.b16 %v503
        %v728 = vpack.c.b16 %v713, %v712
        %v729 = vpack.c.b16 %v715, %v714
        %v730 = vpack.c.b16 %v717, %v716
        %v731 = vpack.c.b16 %v719, %v718
        %v732 = vpack.c.b16 %v721, %v720
        %v733 = vpack.c.b16 %v723, %v722
        %v734 = vpack.c.b16 %v725, %v724
        %v735 = vpack.c.b16 %v727, %v726
        %744 = vmatpush.bf16.msra.mxu0 %v735
        %745 = vmatpush.bf16.msra.mxu0 %v734
        %746 = vmatpush.bf16.msra.mxu0 %v733
        %747 = vmatpush.bf16.msra.mxu0 %v732
        %748 = vmatpush.bf16.msra.mxu0 %v731
        %749 = vmatpush.bf16.msra.mxu0 %v730
        %750 = vmatpush.bf16.msra.mxu0 %v729
        %751 = vmatpush.bf16.msra.mxu0 %v728
        %752 = vmatmul.bf16.gmra.mxu0 %v632
        %v753 = vpop.f32.mrf.mxu0
        %v754 = vadd.f32 0.0, %v753
        %v755 = vpop.f32.mrf.mxu0
        %v756 = vadd.f32 0.0, %v755
        %757 = vmatmul.bf16.gmra.mxu0 %v633
        %v758 = vpop.f32.mrf.mxu0
        %v759 = vadd.f32 0.0, %v758
        %v760 = vpop.f32.mrf.mxu0
        %v761 = vadd.f32 0.0, %v760
        %762 = vmatmul.bf16.gmra.mxu0 %v634
        %v763 = vpop.f32.mrf.mxu0
        %v764 = vadd.f32 0.0, %v763
        %v765 = vpop.f32.mrf.mxu0
        %v766 = vadd.f32 0.0, %v765
        %767 = vmatmul.bf16.gmra.mxu0 %v635
        %v768 = vpop.f32.mrf.mxu0
        %v769 = vadd.f32 0.0, %v768
        %v770 = vpop.f32.mrf.mxu0
        %v771 = vadd.f32 0.0, %v770
        %772 = vmatmul.bf16.gmra.mxu0 %v636
        %v773 = vpop.f32.mrf.mxu0
        %v774 = vadd.f32 0.0, %v773
        %v775 = vpop.f32.mrf.mxu0
        %v776 = vadd.f32 0.0, %v775
        %777 = vmatmul.bf16.gmra.mxu0 %v637
        %v778 = vpop.f32.mrf.mxu0
        %v779 = vadd.f32 0.0, %v778
        %v780 = vpop.f32.mrf.mxu0
        %v781 = vadd.f32 0.0, %v780
        %782 = vmatmul.bf16.gmra.mxu0 %v638
        %v783 = vpop.f32.mrf.mxu0
        %v784 = vadd.f32 0.0, %v783
        %v785 = vpop.f32.mrf.mxu0
        %v786 = vadd.f32 0.0, %v785
        %787 = vmatmul.bf16.gmra.mxu0 %v639
        %v788 = vpop.f32.mrf.mxu0
        %v789 = vadd.f32 0.0, %v788
        %v790 = vpop.f32.mrf.mxu0
        %v791 = vadd.f32 0.0, %v790
        %792 = vmatmul.bf16.gmra.mxu0 %v640
        %v793 = vpop.f32.mrf.mxu0
        %v794 = vadd.f32 0.0, %v793
        %v795 = vpop.f32.mrf.mxu0
        %v796 = vadd.f32 0.0, %v795
        %797 = vmatmul.bf16.gmra.mxu0 %v641
        %v798 = vpop.f32.mrf.mxu0
        %v799 = vadd.f32 0.0, %v798
        %v800 = vpop.f32.mrf.mxu0
        %v801 = vadd.f32 0.0, %v800
        %802 = vmatmul.bf16.gmra.mxu0 %v642
        %v803 = vpop.f32.mrf.mxu0
        %v804 = vadd.f32 0.0, %v803
        %v805 = vpop.f32.mrf.mxu0
        %v806 = vadd.f32 0.0, %v805
        %807 = vmatmul.bf16.gmra.mxu0 %v643
        %v808 = vpop.f32.mrf.mxu0
        %v809 = vadd.f32 0.0, %v808
        %v810 = vpop.f32.mrf.mxu0
        %v811 = vadd.f32 0.0, %v810
        %812 = vmatmul.bf16.gmra.mxu0 %v644
        %v813 = vpop.f32.mrf.mxu0
        %v814 = vadd.f32 0.0, %v813
        %v815 = vpop.f32.mrf.mxu0
        %v816 = vadd.f32 0.0, %v815
        %817 = vmatmul.bf16.gmra.mxu0 %v645
        %v818 = vpop.f32.mrf.mxu0
        %v819 = vadd.f32 0.0, %v818
        %v820 = vpop.f32.mrf.mxu0
        %v821 = vadd.f32 0.0, %v820
        %822 = vmatmul.bf16.gmra.mxu0 %v646
        %v823 = vpop.f32.mrf.mxu0
        %v824 = vadd.f32 0.0, %v823
        %v825 = vpop.f32.mrf.mxu0
        %v826 = vadd.f32 0.0, %v825
        %827 = vmatmul.bf16.gmra.mxu0 %v647
        %v828 = vpop.f32.mrf.mxu0
        %v829 = vadd.f32 0.0, %v828
        %v830 = vpop.f32.mrf.mxu0
        %v831 = vadd.f32 0.0, %v830
        %832 = vmatmul.bf16.gmra.mxu0 %v648
        %v833 = vpop.f32.mrf.mxu0
        %v834 = vadd.f32 0.0, %v833
        %v835 = vpop.f32.mrf.mxu0
        %v836 = vadd.f32 0.0, %v835
        %837 = vmatmul.bf16.gmra.mxu0 %v649
        %v838 = vpop.f32.mrf.mxu0
        %v839 = vadd.f32 0.0, %v838
        %v840 = vpop.f32.mrf.mxu0
        %v841 = vadd.f32 0.0, %v840
        %842 = vmatmul.bf16.gmra.mxu0 %v650
        %v843 = vpop.f32.mrf.mxu0
        %v844 = vadd.f32 0.0, %v843
        %v845 = vpop.f32.mrf.mxu0
        %v846 = vadd.f32 0.0, %v845
        %847 = vmatmul.bf16.gmra.mxu0 %v651
        %v848 = vpop.f32.mrf.mxu0
        %v849 = vadd.f32 0.0, %v848
        %v850 = vpop.f32.mrf.mxu0
        %v851 = vadd.f32 0.0, %v850
        %852 = vmatmul.bf16.gmra.mxu0 %v652
        %v853 = vpop.f32.mrf.mxu0
        %v854 = vadd.f32 0.0, %v853
        %v855 = vpop.f32.mrf.mxu0
        %v856 = vadd.f32 0.0, %v855
        %857 = vmatmul.bf16.gmra.mxu0 %v653
        %v858 = vpop.f32.mrf.mxu0
        %v859 = vadd.f32 0.0, %v858
        %v860 = vpop.f32.mrf.mxu0
        %v861 = vadd.f32 0.0, %v860
        %862 = vmatmul.bf16.gmra.mxu0 %v654
        %v863 = vpop.f32.mrf.mxu0
        %v864 = vadd.f32 0.0, %v863
        %v865 = vpop.f32.mrf.mxu0
        %v866 = vadd.f32 0.0, %v865
        %867 = vmatmul.bf16.gmra.mxu0 %v655
        %v868 = vpop.f32.mrf.mxu0
        %v869 = vadd.f32 0.0, %v868
        %v870 = vpop.f32.mrf.mxu0
        %v871 = vadd.f32 0.0, %v870
        %872 = vmatmul.bf16.gmra.mxu0 %v656
        %v873 = vpop.f32.mrf.mxu0
        %v874 = vadd.f32 0.0, %v873
        %v875 = vpop.f32.mrf.mxu0
        %v876 = vadd.f32 0.0, %v875
        %877 = vmatmul.bf16.gmra.mxu0 %v657
        %v878 = vpop.f32.mrf.mxu0
        %v879 = vadd.f32 0.0, %v878
        %v880 = vpop.f32.mrf.mxu0
        %v881 = vadd.f32 0.0, %v880
        %882 = vmatmul.bf16.gmra.mxu0 %v658
        %v883 = vpop.f32.mrf.mxu0
        %v884 = vadd.f32 0.0, %v883
        %v885 = vpop.f32.mrf.mxu0
        %v886 = vadd.f32 0.0, %v885
        %887 = vmatmul.bf16.gmra.mxu0 %v659
        %v888 = vpop.f32.mrf.mxu0
        %v889 = vadd.f32 0.0, %v888
        %v890 = vpop.f32.mrf.mxu0
        %v891 = vadd.f32 0.0, %v890
        %892 = vmatmul.bf16.gmra.mxu0 %v660
        %v893 = vpop.f32.mrf.mxu0
        %v894 = vadd.f32 0.0, %v893
        %v895 = vpop.f32.mrf.mxu0
        %v896 = vadd.f32 0.0, %v895
        %897 = vmatmul.bf16.gmra.mxu0 %v661
        %v898 = vpop.f32.mrf.mxu0
        %v899 = vadd.f32 0.0, %v898
        %v900 = vpop.f32.mrf.mxu0
        %v901 = vadd.f32 0.0, %v900
        %902 = vmatmul.bf16.gmra.mxu0 %v662
        %v903 = vpop.f32.mrf.mxu0
        %v904 = vadd.f32 0.0, %v903
        %v905 = vpop.f32.mrf.mxu0
        %v906 = vadd.f32 0.0, %v905
        %907 = vmatmul.bf16.gmra.mxu0 %v663
        %v908 = vpop.f32.mrf.mxu0
        %v909 = vadd.f32 0.0, %v908
        %v910 = vpop.f32.mrf.mxu0
        %v911 = vadd.f32 0.0, %v910
        %912 = vdwg.mxu0
        %v913 = vadd.f32 %v360, %v754
        %v914 = vadd.f32 %v361, %v756
        %v915 = vadd.f32 %v362, %v759
        %v916 = vadd.f32 %v363, %v761
        %v917 = vadd.f32 %v364, %v764
        %v918 = vadd.f32 %v365, %v766
        %v919 = vadd.f32 %v366, %v769
        %v920 = vadd.f32 %v367, %v771
        %v921 = vadd.f32 %v368, %v774
        %v922 = vadd.f32 %v369, %v776
        %v923 = vadd.f32 %v370, %v779
        %v924 = vadd.f32 %v371, %v781
        %v925 = vadd.f32 %v372, %v784
        %v926 = vadd.f32 %v373, %v786
        %v927 = vadd.f32 %v374, %v789
        %v928 = vadd.f32 %v375, %v791
        %v929 = vadd.f32 %v376, %v794
        %v930 = vadd.f32 %v377, %v796
        %v931 = vadd.f32 %v378, %v799
        %v932 = vadd.f32 %v379, %v801
        %v933 = vadd.f32 %v380, %v804
        %v934 = vadd.f32 %v381, %v806
        %v935 = vadd.f32 %v382, %v809
        %v936 = vadd.f32 %v383, %v811
        %v937 = vadd.f32 %v384, %v814
        %v938 = vadd.f32 %v385, %v816
        %v939 = vadd.f32 %v386, %v819
        %v940 = vadd.f32 %v387, %v821
        %v941 = vadd.f32 %v388, %v824
        %v942 = vadd.f32 %v389, %v826
        %v943 = vadd.f32 %v390, %v829
        %v944 = vadd.f32 %v391, %v831
        %v945 = vadd.f32 %v392, %v834
        %v946 = vadd.f32 %v393, %v836
        %v947 = vadd.f32 %v394, %v839
        %v948 = vadd.f32 %v395, %v841
        %v949 = vadd.f32 %v396, %v844
        %v950 = vadd.f32 %v397, %v846
        %v951 = vadd.f32 %v398, %v849
        %v952 = vadd.f32 %v399, %v851
        %v953 = vadd.f32 %v400, %v854
        %v954 = vadd.f32 %v401, %v856
        %v955 = vadd.f32 %v402, %v859
        %v956 = vadd.f32 %v403, %v861
        %v957 = vadd.f32 %v404, %v864
        %v958 = vadd.f32 %v405, %v866
        %v959 = vadd.f32 %v406, %v869
        %v960 = vadd.f32 %v407, %v871
        %v961 = vadd.f32 %v408, %v874
        %v962 = vadd.f32 %v409, %v876
        %v963 = vadd.f32 %v410, %v879
        %v964 = vadd.f32 %v411, %v881
        %v965 = vadd.f32 %v412, %v884
        %v966 = vadd.f32 %v413, %v886
        %v967 = vadd.f32 %v414, %v889
        %v968 = vadd.f32 %v415, %v891
        %v969 = vadd.f32 %v416, %v894
        %v970 = vadd.f32 %v417, %v896
        %v971 = vadd.f32 %v418, %v899
        %v972 = vadd.f32 %v419, %v901
        %v973 = vadd.f32 %v420, %v904
        %v974 = vadd.f32 %v421, %v906
        %v975 = vadd.f32 %v422, %v909
        %v976 = vadd.f32 %v423, %v911
        %977 = vst [vmem:[#allocation2] sm:$0xff] %v913
        %978 = vst [vmem:[#allocation2 + $0x8] sm:$0xff] %v914
        %979 = vst [vmem:[#allocation2 + $0x10] sm:$0xff] %v915
        %980 = vst [vmem:[#allocation2 + $0x18] sm:$0xff] %v916
        %981 = vst [vmem:[#allocation2 + $0x20] sm:$0xff] %v917
        %982 = vst [vmem:[#allocation2 + $0x28] sm:$0xff] %v918
        %983 = vst [vmem:[#allocation2 + $0x30] sm:$0xff] %v919
        %984 = vst [vmem:[#allocation2 + $0x38] sm:$0xff] %v920
        %985 = vst [vmem:[#allocation2 + $0x40] sm:$0xff] %v921
        %986 = vst [vmem:[#allocation2 + $0x48] sm:$0xff] %v922
        %987 = vst [vmem:[#allocation2 + $0x50] sm:$0xff] %v923
        %988 = vst [vmem:[#allocation2 + $0x58] sm:$0xff] %v924
        %989 = vst [vmem:[#allocation2 + $0x60] sm:$0xff] %v925
        %990 = vst [vmem:[#allocation2 + $0x68] sm:$0xff] %v926
        %991 = vst [vmem:[#allocation2 + $0x70] sm:$0xff] %v927
        %992 = vst [vmem:[#allocation2 + $0x78] sm:$0xff] %v928
        %993 = vst [vmem:[#allocation2 + $0x80] sm:$0xff] %v929
        %994 = vst [vmem:[#allocation2 + $0x88] sm:$0xff] %v930
        %995 = vst [vmem:[#allocation2 + $0x90] sm:$0xff] %v931
        %996 = vst [vmem:[#allocation2 + $0x98] sm:$0xff] %v932
        %997 = vst [vmem:[#allocation2 + $0xa0] sm:$0xff] %v933
        %998 = vst [vmem:[#allocation2 + $0xa8] sm:$0xff] %v934
        %999 = vst [vmem:[#allocation2 + $0xb0] sm:$0xff] %v935
        %1000 = vst [vmem:[#allocation2 + $0xb8] sm:$0xff] %v936
        %1001 = vst [vmem:[#allocation2 + $0xc0] sm:$0xff] %v937
        %1002 = vst [vmem:[#allocation2 + $0xc8] sm:$0xff] %v938
        %1003 = vst [vmem:[#allocation2 + $0xd0] sm:$0xff] %v939
        %1004 = vst [vmem:[#allocation2 + $0xd8] sm:$0xff] %v940
        %1005 = vst [vmem:[#allocation2 + $0xe0] sm:$0xff] %v941
        %1006 = vst [vmem:[#allocation2 + $0xe8] sm:$0xff] %v942
        %1007 = vst [vmem:[#allocation2 + $0xf0] sm:$0xff] %v943
        %1008 = vst [vmem:[#allocation2 + $0xf8] sm:$0xff] %v944
        %1009 = vst [vmem:[#allocation2 + $0x100] sm:$0xff] %v945
        %1010 = vst [vmem:[#allocation2 + $0x108] sm:$0xff] %v946
        %1011 = vst [vmem:[#allocation2 + $0x110] sm:$0xff] %v947
        %1012 = vst [vmem:[#allocation2 + $0x118] sm:$0xff] %v948
        %1013 = vst [vmem:[#allocation2 + $0x120] sm:$0xff] %v949
        %1014 = vst [vmem:[#allocation2 + $0x128] sm:$0xff] %v950
        %1015 = vst [vmem:[#allocation2 + $0x130] sm:$0xff] %v951
        %1016 = vst [vmem:[#allocation2 + $0x138] sm:$0xff] %v952
        %1017 = vst [vmem:[#allocation2 + $0x140] sm:$0xff] %v953
        %1018 = vst [vmem:[#allocation2 + $0x148] sm:$0xff] %v954
        %1019 = vst [vmem:[#allocation2 + $0x150] sm:$0xff] %v955
        %1020 = vst [vmem:[#allocation2 + $0x158] sm:$0xff] %v956
        %1021 = vst [vmem:[#allocation2 + $0x160] sm:$0xff] %v957
        %1022 = vst [vmem:[#allocation2 + $0x168] sm:$0xff] %v958
        %1023 = vst [vmem:[#allocation2 + $0x170] sm:$0xff] %v959
        %1024 = vst [vmem:[#allocation2 + $0x178] sm:$0xff] %v960
        %1025 = vst [vmem:[#allocation2 + $0x180] sm:$0xff] %v961
        %1026 = vst [vmem:[#allocation2 + $0x188] sm:$0xff] %v962
        %1027 = vst [vmem:[#allocation2 + $0x190] sm:$0xff] %v963
        %1028 = vst [vmem:[#allocation2 + $0x198] sm:$0xff] %v964
        %1029 = vst [vmem:[#allocation2 + $0x1a0] sm:$0xff] %v965
        %1030 = vst [vmem:[#allocation2 + $0x1a8] sm:$0xff] %v966
        %1031 = vst [vmem:[#allocation2 + $0x1b0] sm:$0xff] %v967
        %1032 = vst [vmem:[#allocation2 + $0x1b8] sm:$0xff] %v968
        %1033 = vst [vmem:[#allocation2 + $0x1c0] sm:$0xff] %v969
        %1034 = vst [vmem:[#allocation2 + $0x1c8] sm:$0xff] %v970
        %1035 = vst [vmem:[#allocation2 + $0x1d0] sm:$0xff] %v971
        %1036 = vst [vmem:[#allocation2 + $0x1d8] sm:$0xff] %v972
        %1037 = vst [vmem:[#allocation2 + $0x1e0] sm:$0xff] %v973
        %1038 = vst [vmem:[#allocation2 + $0x1e8] sm:$0xff] %v974
        %1039 = vst [vmem:[#allocation2 + $0x1f0] sm:$0xff] %v975
        %1040 = vst [vmem:[#allocation2 + $0x1f8] sm:$0xff] %v976
        // Predicated region
        $region41: #{_conv_im2col.1} parent=35 // pred_check
          %p1041 = pneg %p292
        $region42: #{_conv_im2col.1} parent=35 // pred_check_branch
          %1043 = sbr.rel (%p1041) target = $region44
        $region43: #{_conv_im2col.1} parent=35 // pred_region
          %v1044 = vld [vmem:[#allocation2] sm:$0xff]
          %v1045 = vld [vmem:[#allocation2 + $0x8] sm:$0xff]
          %v1046 = vld [vmem:[#allocation2 + $0x10] sm:$0xff]
          %v1047 = vld [vmem:[#allocation2 + $0x18] sm:$0xff]
          %v1048 = vld [vmem:[#allocation2 + $0x20] sm:$0xff]
          %v1049 = vld [vmem:[#allocation2 + $0x28] sm:$0xff]
          %v1050 = vld [vmem:[#allocation2 + $0x30] sm:$0xff]
          %v1051 = vld [vmem:[#allocation2 + $0x38] sm:$0xff]
          %v1052 = vld [vmem:[#allocation2 + $0x40] sm:$0xff]
          %v1053 = vld [vmem:[#allocation2 + $0x48] sm:$0xff]
          %v1054 = vld [vmem:[#allocation2 + $0x50] sm:$0xff]
          %v1055 = vld [vmem:[#allocation2 + $0x58] sm:$0xff]
          %v1056 = vld [vmem:[#allocation2 + $0x60] sm:$0xff]
          %v1057 = vld [vmem:[#allocation2 + $0x68] sm:$0xff]
          %v1058 = vld [vmem:[#allocation2 + $0x70] sm:$0xff]
          %v1059 = vld [vmem:[#allocation2 + $0x78] sm:$0xff]
          %v1060 = vld [vmem:[#allocation2 + $0x80] sm:$0xff]
          %v1061 = vld [vmem:[#allocation2 + $0x88] sm:$0xff]
          %v1062 = vld [vmem:[#allocation2 + $0x90] sm:$0xff]
          %v1063 = vld [vmem:[#allocation2 + $0x98] sm:$0xff]
          %v1064 = vld [vmem:[#allocation2 + $0xa0] sm:$0xff]
          %v1065 = vld [vmem:[#allocation2 + $0xa8] sm:$0xff]
          %v1066 = vld [vmem:[#allocation2 + $0xb0] sm:$0xff]
          %v1067 = vld [vmem:[#allocation2 + $0xb8] sm:$0xff]
          %v1068 = vld [vmem:[#allocation2 + $0xc0] sm:$0xff]
          %v1069 = vld [vmem:[#allocation2 + $0xc8] sm:$0xff]
          %v1070 = vld [vmem:[#allocation2 + $0xd0] sm:$0xff]
          %v1071 = vld [vmem:[#allocation2 + $0xd8] sm:$0xff]
          %v1072 = vld [vmem:[#allocation2 + $0xe0] sm:$0xff]
          %v1073 = vld [vmem:[#allocation2 + $0xe8] sm:$0xff]
          %v1074 = vld [vmem:[#allocation2 + $0xf0] sm:$0xff]
          %v1075 = vld [vmem:[#allocation2 + $0xf8] sm:$0xff]
          %v1076 = vld [vmem:[#allocation2 + $0x100] sm:$0xff]
          %v1077 = vld [vmem:[#allocation2 + $0x108] sm:$0xff]
          %v1078 = vld [vmem:[#allocation2 + $0x110] sm:$0xff]
          %v1079 = vld [vmem:[#allocation2 + $0x118] sm:$0xff]
          %v1080 = vld [vmem:[#allocation2 + $0x120] sm:$0xff]
          %v1081 = vld [vmem:[#allocation2 + $0x128] sm:$0xff]
          %v1082 = vld [vmem:[#allocation2 + $0x130] sm:$0xff]
          %v1083 = vld [vmem:[#allocation2 + $0x138] sm:$0xff]
          %v1084 = vld [vmem:[#allocation2 + $0x140] sm:$0xff]
          %v1085 = vld [vmem:[#allocation2 + $0x148] sm:$0xff]
          %v1086 = vld [vmem:[#allocation2 + $0x150] sm:$0xff]
          %v1087 = vld [vmem:[#allocation2 + $0x158] sm:$0xff]
          %v1088 = vld [vmem:[#allocation2 + $0x160] sm:$0xff]
          %v1089 = vld [vmem:[#allocation2 + $0x168] sm:$0xff]
          %v1090 = vld [vmem:[#allocation2 + $0x170] sm:$0xff]
          %v1091 = vld [vmem:[#allocation2 + $0x178] sm:$0xff]
          %v1092 = vld [vmem:[#allocation2 + $0x180] sm:$0xff]
          %v1093 = vld [vmem:[#allocation2 + $0x188] sm:$0xff]
          %v1094 = vld [vmem:[#allocation2 + $0x190] sm:$0xff]
          %v1095 = vld [vmem:[#allocation2 + $0x198] sm:$0xff]
          %v1096 = vld [vmem:[#allocation2 + $0x1a0] sm:$0xff]
          %v1097 = vld [vmem:[#allocation2 + $0x1a8] sm:$0xff]
          %v1098 = vld [vmem:[#allocation2 + $0x1b0] sm:$0xff]
          %v1099 = vld [vmem:[#allocation2 + $0x1b8] sm:$0xff]
          %v1100 = vld [vmem:[#allocation2 + $0x1c0] sm:$0xff]
          %v1101 = vld [vmem:[#allocation2 + $0x1c8] sm:$0xff]
          %v1102 = vld [vmem:[#allocation2 + $0x1d0] sm:$0xff]
          %v1103 = vld [vmem:[#allocation2 + $0x1d8] sm:$0xff]
          %v1104 = vld [vmem:[#allocation2 + $0x1e0] sm:$0xff]
          %v1105 = vld [vmem:[#allocation2 + $0x1e8] sm:$0xff]
          %v1106 = vld [vmem:[#allocation2 + $0x1f0] sm:$0xff]
          %v1107 = vld [vmem:[#allocation2 + $0x1f8] sm:$0xff]
          %v1108 = vld [vmem:[%s287] sm:$0x1]
          %v1110 = vperm.slane %v1108, 0
          %v1112 = vmul.f32 %v1044, %v1110
          %v1113 = vmul.f32 %v1045, %v1110
          %v1114 = vmul.f32 %v1046, %v1110
          %v1115 = vmul.f32 %v1047, %v1110
          %v1116 = vmul.f32 %v1048, %v1110
          %v1117 = vmul.f32 %v1049, %v1110
          %v1118 = vmul.f32 %v1050, %v1110
          %v1119 = vmul.f32 %v1051, %v1110
          %v1120 = vmul.f32 %v1052, %v1110
          %v1121 = vmul.f32 %v1053, %v1110
          %v1122 = vmul.f32 %v1054, %v1110
          %v1123 = vmul.f32 %v1055, %v1110
          %v1124 = vmul.f32 %v1056, %v1110
          %v1125 = vmul.f32 %v1057, %v1110
          %v1126 = vmul.f32 %v1058, %v1110
          %v1127 = vmul.f32 %v1059, %v1110
          %v1128 = vmul.f32 %v1060, %v1110
          %v1129 = vmul.f32 %v1061, %v1110
          %v1130 = vmul.f32 %v1062, %v1110
          %v1131 = vmul.f32 %v1063, %v1110
          %v1132 = vmul.f32 %v1064, %v1110
          %v1133 = vmul.f32 %v1065, %v1110
          %v1134 = vmul.f32 %v1066, %v1110
          %v1135 = vmul.f32 %v1067, %v1110
          %v1136 = vmul.f32 %v1068, %v1110
          %v1137 = vmul.f32 %v1069, %v1110
          %v1138 = vmul.f32 %v1070, %v1110
          %v1139 = vmul.f32 %v1071, %v1110
          %v1140 = vmul.f32 %v1072, %v1110
          %v1141 = vmul.f32 %v1073, %v1110
          %v1142 = vmul.f32 %v1074, %v1110
          %v1143 = vmul.f32 %v1075, %v1110
          %v1144 = vmul.f32 %v1076, %v1110
          %v1145 = vmul.f32 %v1077, %v1110
          %v1146 = vmul.f32 %v1078, %v1110
          %v1147 = vmul.f32 %v1079, %v1110
          %v1148 = vmul.f32 %v1080, %v1110
          %v1149 = vmul.f32 %v1081, %v1110
          %v1150 = vmul.f32 %v1082, %v1110
          %v1151 = vmul.f32 %v1083, %v1110
          %v1152 = vmul.f32 %v1084, %v1110
          %v1153 = vmul.f32 %v1085, %v1110
          %v1154 = vmul.f32 %v1086, %v1110
          %v1155 = vmul.f32 %v1087, %v1110
          %v1156 = vmul.f32 %v1088, %v1110
          %v1157 = vmul.f32 %v1089, %v1110
          %v1158 = vmul.f32 %v1090, %v1110
          %v1159 = vmul.f32 %v1091, %v1110
          %v1160 = vmul.f32 %v1092, %v1110
          %v1161 = vmul.f32 %v1093, %v1110
          %v1162 = vmul.f32 %v1094, %v1110
          %v1163 = vmul.f32 %v1095, %v1110
          %v1164 = vmul.f32 %v1096, %v1110
          %v1165 = vmul.f32 %v1097, %v1110
          %v1166 = vmul.f32 %v1098, %v1110
          %v1167 = vmul.f32 %v1099, %v1110
          %v1168 = vmul.f32 %v1100, %v1110
          %v1169 = vmul.f32 %v1101, %v1110
          %v1170 = vmul.f32 %v1102, %v1110
          %v1171 = vmul.f32 %v1103, %v1110
          %v1172 = vmul.f32 %v1104, %v1110
          %v1173 = vmul.f32 %v1105, %v1110
          %v1174 = vmul.f32 %v1106, %v1110
          %v1175 = vmul.f32 %v1107, %v1110
          %v1176 = vld [vmem:[%s290] sm:$0x1]
          %v1178 = vperm.slane %v1176, 0
          %v1180 = vadd.f32 %v1112, %v1178
          %v1181 = vadd.f32 %v1113, %v1178
          %v1182 = vadd.f32 %v1114, %v1178
          %v1183 = vadd.f32 %v1115, %v1178
          %v1184 = vadd.f32 %v1116, %v1178
          %v1185 = vadd.f32 %v1117, %v1178
          %v1186 = vadd.f32 %v1118, %v1178
          %v1187 = vadd.f32 %v1119, %v1178
          %v1188 = vadd.f32 %v1120, %v1178
          %v1189 = vadd.f32 %v1121, %v1178
          %v1190 = vadd.f32 %v1122, %v1178
          %v1191 = vadd.f32 %v1123, %v1178
          %v1192 = vadd.f32 %v1124, %v1178
          %v1193 = vadd.f32 %v1125, %v1178
          %v1194 = vadd.f32 %v1126, %v1178
          %v1195 = vadd.f32 %v1127, %v1178
          %v1196 = vadd.f32 %v1128, %v1178
          %v1197 = vadd.f32 %v1129, %v1178
          %v1198 = vadd.f32 %v1130, %v1178
          %v1199 = vadd.f32 %v1131, %v1178
          %v1200 = vadd.f32 %v1132, %v1178
          %v1201 = vadd.f32 %v1133, %v1178
          %v1202 = vadd.f32 %v1134, %v1178
          %v1203 = vadd.f32 %v1135, %v1178
          %v1204 = vadd.f32 %v1136, %v1178
          %v1205 = vadd.f32 %v1137, %v1178
          %v1206 = vadd.f32 %v1138, %v1178
          %v1207 = vadd.f32 %v1139, %v1178
          %v1208 = vadd.f32 %v1140, %v1178
          %v1209 = vadd.f32 %v1141, %v1178
          %v1210 = vadd.f32 %v1142, %v1178
          %v1211 = vadd.f32 %v1143, %v1178
          %v1212 = vadd.f32 %v1144, %v1178
          %v1213 = vadd.f32 %v1145, %v1178
          %v1214 = vadd.f32 %v1146, %v1178
          %v1215 = vadd.f32 %v1147, %v1178
          %v1216 = vadd.f32 %v1148, %v1178
          %v1217 = vadd.f32 %v1149, %v1178
          %v1218 = vadd.f32 %v1150, %v1178
          %v1219 = vadd.f32 %v1151, %v1178
          %v1220 = vadd.f32 %v1152, %v1178
          %v1221 = vadd.f32 %v1153, %v1178
          %v1222 = vadd.f32 %v1154, %v1178
          %v1223 = vadd.f32 %v1155, %v1178
          %v1224 = vadd.f32 %v1156, %v1178
          %v1225 = vadd.f32 %v1157, %v1178
          %v1226 = vadd.f32 %v1158, %v1178
          %v1227 = vadd.f32 %v1159, %v1178
          %v1228 = vadd.f32 %v1160, %v1178
          %v1229 = vadd.f32 %v1161, %v1178
          %v1230 = vadd.f32 %v1162, %v1178
          %v1231 = vadd.f32 %v1163, %v1178
          %v1232 = vadd.f32 %v1164, %v1178
          %v1233 = vadd.f32 %v1165, %v1178
          %v1234 = vadd.f32 %v1166, %v1178
          %v1235 = vadd.f32 %v1167, %v1178
          %v1236 = vadd.f32 %v1168, %v1178
          %v1237 = vadd.f32 %v1169, %v1178
          %v1238 = vadd.f32 %v1170, %v1178
          %v1239 = vadd.f32 %v1171, %v1178
          %v1240 = vadd.f32 %v1172, %v1178
          %v1241 = vadd.f32 %v1173, %v1178
          %v1242 = vadd.f32 %v1174, %v1178
          %v1243 = vadd.f32 %v1175, %v1178
          %v1244 = vmin.f32 %v1180, 20.0
          %v1245 = vmin.f32 %v1181, 20.0
          %v1246 = vmin.f32 %v1182, 20.0
          %v1247 = vmin.f32 %v1183, 20.0
          %v1248 = vmin.f32 %v1184, 20.0
          %v1249 = vmin.f32 %v1185, 20.0
          %v1250 = vmin.f32 %v1186, 20.0
          %v1251 = vmin.f32 %v1187, 20.0
          %v1252 = vmin.f32 %v1188, 20.0
          %v1253 = vmin.f32 %v1189, 20.0
          %v1254 = vmin.f32 %v1190, 20.0
          %v1255 = vmin.f32 %v1191, 20.0
          %v1256 = vmin.f32 %v1192, 20.0
          %v1257 = vmin.f32 %v1193, 20.0
          %v1258 = vmin.f32 %v1194, 20.0
          %v1259 = vmin.f32 %v1195, 20.0
          %v1260 = vmin.f32 %v1196, 20.0
          %v1261 = vmin.f32 %v1197, 20.0
          %v1262 = vmin.f32 %v1198, 20.0
          %v1263 = vmin.f32 %v1199, 20.0
          %v1264 = vmin.f32 %v1200, 20.0
          %v1265 = vmin.f32 %v1201, 20.0
          %v1266 = vmin.f32 %v1202, 20.0
          %v1267 = vmin.f32 %v1203, 20.0
          %v1268 = vmin.f32 %v1204, 20.0
          %v1269 = vmin.f32 %v1205, 20.0
          %v1270 = vmin.f32 %v1206, 20.0
          %v1271 = vmin.f32 %v1207, 20.0
          %v1272 = vmin.f32 %v1208, 20.0
          %v1273 = vmin.f32 %v1209, 20.0
          %v1274 = vmin.f32 %v1210, 20.0
          %v1275 = vmin.f32 %v1211, 20.0
          %v1276 = vmin.f32 %v1212, 20.0
          %v1277 = vmin.f32 %v1213, 20.0
          %v1278 = vmin.f32 %v1214, 20.0
          %v1279 = vmin.f32 %v1215, 20.0
          %v1280 = vmin.f32 %v1216, 20.0
          %v1281 = vmin.f32 %v1217, 20.0
          %v1282 = vmin.f32 %v1218, 20.0
          %v1283 = vmin.f32 %v1219, 20.0
          %v1284 = vmin.f32 %v1220, 20.0
          %v1285 = vmin.f32 %v1221, 20.0
          %v1286 = vmin.f32 %v1222, 20.0
          %v1287 = vmin.f32 %v1223, 20.0
          %v1288 = vmin.f32 %v1224, 20.0
          %v1289 = vmin.f32 %v1225, 20.0
          %v1290 = vmin.f32 %v1226, 20.0
          %v1291 = vmin.f32 %v1227, 20.0
          %v1292 = vmin.f32 %v1228, 20.0
          %v1293 = vmin.f32 %v1229, 20.0
          %v1294 = vmin.f32 %v1230, 20.0
          %v1295 = vmin.f32 %v1231, 20.0
          %v1296 = vmin.f32 %v1232, 20.0
          %v1297 = vmin.f32 %v1233, 20.0
          %v1298 = vmin.f32 %v1234, 20.0
          %v1299 = vmin.f32 %v1235, 20.0
          %v1300 = vmin.f32 %v1236, 20.0
          %v1301 = vmin.f32 %v1237, 20.0
          %v1302 = vmin.f32 %v1238, 20.0
          %v1303 = vmin.f32 %v1239, 20.0
          %v1304 = vmin.f32 %v1240, 20.0
          %v1305 = vmin.f32 %v1241, 20.0
          %v1306 = vmin.f32 %v1242, 20.0
          %v1307 = vmin.f32 %v1243, 20.0
          %v1308 = vmul.f32 %v1244, 1.442695
          %v1309 = vpow.pop %v1308
          %v1310 = vmul.f32 %v1245, 1.442695
          %v1311 = vpow.pop %v1310
          %v1312 = vmul.f32 %v1246, 1.442695
          %v1313 = vpow.pop %v1312
          %v1314 = vmul.f32 %v1247, 1.442695
          %v1315 = vpow.pop %v1314
          %v1316 = vmul.f32 %v1248, 1.442695
          %v1317 = vpow.pop %v1316
          %v1318 = vmul.f32 %v1249, 1.442695
          %v1319 = vpow.pop %v1318
          %v1320 = vmul.f32 %v1250, 1.442695
          %v1321 = vpow.pop %v1320
          %v1322 = vmul.f32 %v1251, 1.442695
          %v1323 = vpow.pop %v1322
          %v1324 = vmul.f32 %v1252, 1.442695
          %v1325 = vpow.pop %v1324
          %v1326 = vmul.f32 %v1253, 1.442695
          %v1327 = vpow.pop %v1326
          %v1328 = vmul.f32 %v1254, 1.442695
          %v1329 = vpow.pop %v1328
          %v1330 = vmul.f32 %v1255, 1.442695
          %v1331 = vpow.pop %v1330
          %v1332 = vmul.f32 %v1256, 1.442695
          %v1333 = vpow.pop %v1332
          %v1334 = vmul.f32 %v1257, 1.442695
          %v1335 = vpow.pop %v1334
          %v1336 = vmul.f32 %v1258, 1.442695
          %v1337 = vpow.pop %v1336
          %v1338 = vmul.f32 %v1259, 1.442695
          %v1339 = vpow.pop %v1338
          %v1340 = vmul.f32 %v1260, 1.442695
          %v1341 = vpow.pop %v1340
          %v1342 = vmul.f32 %v1261, 1.442695
          %v1343 = vpow.pop %v1342
          %v1344 = vmul.f32 %v1262, 1.442695
          %v1345 = vpow.pop %v1344
          %v1346 = vmul.f32 %v1263, 1.442695
          %v1347 = vpow.pop %v1346
          %v1348 = vmul.f32 %v1264, 1.442695
          %v1349 = vpow.pop %v1348
          %v1350 = vmul.f32 %v1265, 1.442695
          %v1351 = vpow.pop %v1350
          %v1352 = vmul.f32 %v1266, 1.442695
          %v1353 = vpow.pop %v1352
          %v1354 = vmul.f32 %v1267, 1.442695
          %v1355 = vpow.pop %v1354
          %v1356 = vmul.f32 %v1268, 1.442695
          %v1357 = vpow.pop %v1356
          %v1358 = vmul.f32 %v1269, 1.442695
          %v1359 = vpow.pop %v1358
          %v1360 = vmul.f32 %v1270, 1.442695
          %v1361 = vpow.pop %v1360
          %v1362 = vmul.f32 %v1271, 1.442695
          %v1363 = vpow.pop %v1362
          %v1364 = vmul.f32 %v1272, 1.442695
          %v1365 = vpow.pop %v1364
          %v1366 = vmul.f32 %v1273, 1.442695
          %v1367 = vpow.pop %v1366
          %v1368 = vmul.f32 %v1274, 1.442695
          %v1369 = vpow.pop %v1368
          %v1370 = vmul.f32 %v1275, 1.442695
          %v1371 = vpow.pop %v1370
          %v1372 = vmul.f32 %v1276, 1.442695
          %v1373 = vpow.pop %v1372
          %v1374 = vmul.f32 %v1277, 1.442695
          %v1375 = vpow.pop %v1374
          %v1376 = vmul.f32 %v1278, 1.442695
          %v1377 = vpow.pop %v1376
          %v1378 = vmul.f32 %v1279, 1.442695
          %v1379 = vpow.pop %v1378
          %v1380 = vmul.f32 %v1280, 1.442695
          %v1381 = vpow.pop %v1380
          %v1382 = vmul.f32 %v1281, 1.442695
          %v1383 = vpow.pop %v1382
          %v1384 = vmul.f32 %v1282, 1.442695
          %v1385 = vpow.pop %v1384
          %v1386 = vmul.f32 %v1283, 1.442695
          %v1387 = vpow.pop %v1386
          %v1388 = vmul.f32 %v1284, 1.442695
          %v1389 = vpow.pop %v1388
          %v1390 = vmul.f32 %v1285, 1.442695
          %v1391 = vpow.pop %v1390
          %v1392 = vmul.f32 %v1286, 1.442695
          %v1393 = vpow.pop %v1392
          %v1394 = vmul.f32 %v1287, 1.442695
          %v1395 = vpow.pop %v1394
          %v1396 = vmul.f32 %v1288, 1.442695
          %v1397 = vpow.pop %v1396
          %v1398 = vmul.f32 %v1289, 1.442695
          %v1399 = vpow.pop %v1398
          %v1400 = vmul.f32 %v1290, 1.442695
          %v1401 = vpow.pop %v1400
          %v1402 = vmul.f32 %v1291, 1.442695
          %v1403 = vpow.pop %v1402
          %v1404 = vmul.f32 %v1292, 1.442695
          %v1405 = vpow.pop %v1404
          %v1406 = vmul.f32 %v1293, 1.442695
          %v1407 = vpow.pop %v1406
          %v1408 = vmul.f32 %v1294, 1.442695
          %v1409 = vpow.pop %v1408
          %v1410 = vmul.f32 %v1295, 1.442695
          %v1411 = vpow.pop %v1410
          %v1412 = vmul.f32 %v1296, 1.442695
          %v1413 = vpow.pop %v1412
          %v1414 = vmul.f32 %v1297, 1.442695
          %v1415 = vpow.pop %v1414
          %v1416 = vmul.f32 %v1298, 1.442695
          %v1417 = vpow.pop %v1416
          %v1418 = vmul.f32 %v1299, 1.442695
          %v1419 = vpow.pop %v1418
          %v1420 = vmul.f32 %v1300, 1.442695
          %v1421 = vpow.pop %v1420
          %v1422 = vmul.f32 %v1301, 1.442695
          %v1423 = vpow.pop %v1422
          %v1424 = vmul.f32 %v1302, 1.442695
          %v1425 = vpow.pop %v1424
          %v1426 = vmul.f32 %v1303, 1.442695
          %v1427 = vpow.pop %v1426
          %v1428 = vmul.f32 %v1304, 1.442695
          %v1429 = vpow.pop %v1428
          %v1430 = vmul.f32 %v1305, 1.442695
          %v1431 = vpow.pop %v1430
          %v1432 = vmul.f32 %v1306, 1.442695
          %v1433 = vpow.pop %v1432
          %v1434 = vmul.f32 %v1307, 1.442695
          %v1435 = vpow.pop %v1434
          %v1436 = vadd.f32 %v1309, 2.0
          %v1437 = vadd.f32 %v1311, 2.0
          %v1438 = vadd.f32 %v1313, 2.0
          %v1439 = vadd.f32 %v1315, 2.0
          %v1440 = vadd.f32 %v1317, 2.0
          %v1441 = vadd.f32 %v1319, 2.0
          %v1442 = vadd.f32 %v1321, 2.0
          %v1443 = vadd.f32 %v1323, 2.0
          %v1444 = vadd.f32 %v1325, 2.0
          %v1445 = vadd.f32 %v1327, 2.0
          %v1446 = vadd.f32 %v1329, 2.0
          %v1447 = vadd.f32 %v1331, 2.0
          %v1448 = vadd.f32 %v1333, 2.0
          %v1449 = vadd.f32 %v1335, 2.0
          %v1450 = vadd.f32 %v1337, 2.0
          %v1451 = vadd.f32 %v1339, 2.0
          %v1452 = vadd.f32 %v1341, 2.0
          %v1453 = vadd.f32 %v1343, 2.0
          %v1454 = vadd.f32 %v1345, 2.0
          %v1455 = vadd.f32 %v1347, 2.0
          %v1456 = vadd.f32 %v1349, 2.0
          %v1457 = vadd.f32 %v1351, 2.0
          %v1458 = vadd.f32 %v1353, 2.0
          %v1459 = vadd.f32 %v1355, 2.0
          %v1460 = vadd.f32 %v1357, 2.0
          %v1461 = vadd.f32 %v1359, 2.0
          %v1462 = vadd.f32 %v1361, 2.0
          %v1463 = vadd.f32 %v1363, 2.0
          %v1464 = vadd.f32 %v1365, 2.0
          %v1465 = vadd.f32 %v1367, 2.0
          %v1466 = vadd.f32 %v1369, 2.0
          %v1467 = vadd.f32 %v1371, 2.0
          %v1468 = vadd.f32 %v1373, 2.0
          %v1469 = vadd.f32 %v1375, 2.0
          %v1470 = vadd.f32 %v1377, 2.0
          %v1471 = vadd.f32 %v1379, 2.0
          %v1472 = vadd.f32 %v1381, 2.0
          %v1473 = vadd.f32 %v1383, 2.0
          %v1474 = vadd.f32 %v1385, 2.0
          %v1475 = vadd.f32 %v1387, 2.0
          %v1476 = vadd.f32 %v1389, 2.0
          %v1477 = vadd.f32 %v1391, 2.0
          %v1478 = vadd.f32 %v1393, 2.0
          %v1479 = vadd.f32 %v1395, 2.0
          %v1480 = vadd.f32 %v1397, 2.0
          %v1481 = vadd.f32 %v1399, 2.0
          %v1482 = vadd.f32 %v1401, 2.0
          %v1483 = vadd.f32 %v1403, 2.0
          %v1484 = vadd.f32 %v1405, 2.0
          %v1485 = vadd.f32 %v1407, 2.0
          %v1486 = vadd.f32 %v1409, 2.0
          %v1487 = vadd.f32 %v1411, 2.0
          %v1488 = vadd.f32 %v1413, 2.0
          %v1489 = vadd.f32 %v1415, 2.0
          %v1490 = vadd.f32 %v1417, 2.0
          %v1491 = vadd.f32 %v1419, 2.0
          %v1492 = vadd.f32 %v1421, 2.0
          %v1493 = vadd.f32 %v1423, 2.0
          %v1494 = vadd.f32 %v1425, 2.0
          %v1495 = vadd.f32 %v1427, 2.0
          %v1496 = vadd.f32 %v1429, 2.0
          %v1497 = vadd.f32 %v1431, 2.0
          %v1498 = vadd.f32 %v1433, 2.0
          %v1499 = vadd.f32 %v1435, 2.0
          %v1500 = vmul.f32 %v1309, %v1436
          %v1501 = vmul.f32 %v1311, %v1437
          %v1502 = vmul.f32 %v1313, %v1438
          %v1503 = vmul.f32 %v1315, %v1439
          %v1504 = vmul.f32 %v1317, %v1440
          %v1505 = vmul.f32 %v1319, %v1441
          %v1506 = vmul.f32 %v1321, %v1442
          %v1507 = vmul.f32 %v1323, %v1443
          %v1508 = vmul.f32 %v1325, %v1444
          %v1509 = vmul.f32 %v1327, %v1445
          %v1510 = vmul.f32 %v1329, %v1446
          %v1511 = vmul.f32 %v1331, %v1447
          %v1512 = vmul.f32 %v1333, %v1448
          %v1513 = vmul.f32 %v1335, %v1449
          %v1514 = vmul.f32 %v1337, %v1450
          %v1515 = vmul.f32 %v1339, %v1451
          %v1516 = vmul.f32 %v1341, %v1452
          %v1517 = vmul.f32 %v1343, %v1453
          %v1518 = vmul.f32 %v1345, %v1454
          %v1519 = vmul.f32 %v1347, %v1455
          %v1520 = vmul.f32 %v1349, %v1456
          %v1521 = vmul.f32 %v1351, %v1457
          %v1522 = vmul.f32 %v1353, %v1458
          %v1523 = vmul.f32 %v1355, %v1459
          %v1524 = vmul.f32 %v1357, %v1460
          %v1525 = vmul.f32 %v1359, %v1461
          %v1526 = vmul.f32 %v1361, %v1462
          %v1527 = vmul.f32 %v1363, %v1463
          %v1528 = vmul.f32 %v1365, %v1464
          %v1529 = vmul.f32 %v1367, %v1465
          %v1530 = vmul.f32 %v1369, %v1466
          %v1531 = vmul.f32 %v1371, %v1467
          %v1532 = vmul.f32 %v1373, %v1468
          %v1533 = vmul.f32 %v1375, %v1469
          %v1534 = vmul.f32 %v1377, %v1470
          %v1535 = vmul.f32 %v1379, %v1471
          %v1536 = vmul.f32 %v1381, %v1472
          %v1537 = vmul.f32 %v1383, %v1473
          %v1538 = vmul.f32 %v1385, %v1474
          %v1539 = vmul.f32 %v1387, %v1475
          %v1540 = vmul.f32 %v1389, %v1476
          %v1541 = vmul.f32 %v1391, %v1477
          %v1542 = vmul.f32 %v1393, %v1478
          %v1543 = vmul.f32 %v1395, %v1479
          %v1544 = vmul.f32 %v1397, %v1480
          %v1545 = vmul.f32 %v1399, %v1481
          %v1546 = vmul.f32 %v1401, %v1482
          %v1547 = vmul.f32 %v1403, %v1483
          %v1548 = vmul.f32 %v1405, %v1484
          %v1549 = vmul.f32 %v1407, %v1485
          %v1550 = vmul.f32 %v1409, %v1486
          %v1551 = vmul.f32 %v1411, %v1487
          %v1552 = vmul.f32 %v1413, %v1488
          %v1553 = vmul.f32 %v1415, %v1489
          %v1554 = vmul.f32 %v1417, %v1490
          %v1555 = vmul.f32 %v1419, %v1491
          %v1556 = vmul.f32 %v1421, %v1492
          %v1557 = vmul.f32 %v1423, %v1493
          %v1558 = vmul.f32 %v1425, %v1494
          %v1559 = vmul.f32 %v1427, %v1495
          %v1560 = vmul.f32 %v1429, %v1496
          %v1561 = vmul.f32 %v1431, %v1497
          %v1562 = vmul.f32 %v1433, %v1498
          %v1563 = vmul.f32 %v1435, %v1499
          %v1564 = vmul.f32 %v1180, %v1500
          %v1565 = vmul.f32 %v1181, %v1501
          %v1566 = vmul.f32 %v1182, %v1502
          %v1567 = vmul.f32 %v1183, %v1503
          %v1568 = vmul.f32 %v1184, %v1504
          %v1569 = vmul.f32 %v1185, %v1505
          %v1570 = vmul.f32 %v1186, %v1506
          %v1571 = vmul.f32 %v1187, %v1507
          %v1572 = vmul.f32 %v1188, %v1508
          %v1573 = vmul.f32 %v1189, %v1509
          %v1574 = vmul.f32 %v1190, %v1510
          %v1575 = vmul.f32 %v1191, %v1511
          %v1576 = vmul.f32 %v1192, %v1512
          %v1577 = vmul.f32 %v1193, %v1513
          %v1578 = vmul.f32 %v1194, %v1514
          %v1579 = vmul.f32 %v1195, %v1515
          %v1580 = vmul.f32 %v1196, %v1516
          %v1581 = vmul.f32 %v1197, %v1517
          %v1582 = vmul.f32 %v1198, %v1518
          %v1583 = vmul.f32 %v1199, %v1519
          %v1584 = vmul.f32 %v1200, %v1520
          %v1585 = vmul.f32 %v1201, %v1521
          %v1586 = vmul.f32 %v1202, %v1522
          %v1587 = vmul.f32 %v1203, %v1523
          %v1588 = vmul.f32 %v1204, %v1524
          %v1589 = vmul.f32 %v1205, %v1525
          %v1590 = vmul.f32 %v1206, %v1526
          %v1591 = vmul.f32 %v1207, %v1527
          %v1592 = vmul.f32 %v1208, %v1528
          %v1593 = vmul.f32 %v1209, %v1529
          %v1594 = vmul.f32 %v1210, %v1530
          %v1595 = vmul.f32 %v1211, %v1531
          %v1596 = vmul.f32 %v1212, %v1532
          %v1597 = vmul.f32 %v1213, %v1533
          %v1598 = vmul.f32 %v1214, %v1534
          %v1599 = vmul.f32 %v1215, %v1535
          %v1600 = vmul.f32 %v1216, %v1536
          %v1601 = vmul.f32 %v1217, %v1537
          %v1602 = vmul.f32 %v1218, %v1538
          %v1603 = vmul.f32 %v1219, %v1539
          %v1604 = vmul.f32 %v1220, %v1540
          %v1605 = vmul.f32 %v1221, %v1541
          %v1606 = vmul.f32 %v1222, %v1542
          %v1607 = vmul.f32 %v1223, %v1543
          %v1608 = vmul.f32 %v1224, %v1544
          %v1609 = vmul.f32 %v1225, %v1545
          %v1610 = vmul.f32 %v1226, %v1546
          %v1611 = vmul.f32 %v1227, %v1547
          %v1612 = vmul.f32 %v1228, %v1548
          %v1613 = vmul.f32 %v1229, %v1549
          %v1614 = vmul.f32 %v1230, %v1550
          %v1615 = vmul.f32 %v1231, %v1551
          %v1616 = vmul.f32 %v1232, %v1552
          %v1617 = vmul.f32 %v1233, %v1553
          %v1618 = vmul.f32 %v1234, %v1554
          %v1619 = vmul.f32 %v1235, %v1555
          %v1620 = vmul.f32 %v1236, %v1556
          %v1621 = vmul.f32 %v1237, %v1557
          %v1622 = vmul.f32 %v1238, %v1558
          %v1623 = vmul.f32 %v1239, %v1559
          %v1624 = vmul.f32 %v1240, %v1560
          %v1625 = vmul.f32 %v1241, %v1561
          %v1626 = vmul.f32 %v1242, %v1562
          %v1627 = vmul.f32 %v1243, %v1563
          %v1628 = vadd.f32 %v1500, 2.0
          %v1629 = vadd.f32 %v1501, 2.0
          %v1630 = vadd.f32 %v1502, 2.0
          %v1631 = vadd.f32 %v1503, 2.0
          %v1632 = vadd.f32 %v1504, 2.0
          %v1633 = vadd.f32 %v1505, 2.0
          %v1634 = vadd.f32 %v1506, 2.0
          %v1635 = vadd.f32 %v1507, 2.0
          %v1636 = vadd.f32 %v1508, 2.0
          %v1637 = vadd.f32 %v1509, 2.0
          %v1638 = vadd.f32 %v1510, 2.0
          %v1639 = vadd.f32 %v1511, 2.0
          %v1640 = vadd.f32 %v1512, 2.0
          %v1641 = vadd.f32 %v1513, 2.0
          %v1642 = vadd.f32 %v1514, 2.0
          %v1643 = vadd.f32 %v1515, 2.0
          %v1644 = vadd.f32 %v1516, 2.0
          %v1645 = vadd.f32 %v1517, 2.0
          %v1646 = vadd.f32 %v1518, 2.0
          %v1647 = vadd.f32 %v1519, 2.0
          %v1648 = vadd.f32 %v1520, 2.0
          %v1649 = vadd.f32 %v1521, 2.0
          %v1650 = vadd.f32 %v1522, 2.0
          %v1651 = vadd.f32 %v1523, 2.0
          %v1652 = vadd.f32 %v1524, 2.0
          %v1653 = vadd.f32 %v1525, 2.0
          %v1654 = vadd.f32 %v1526, 2.0
          %v1655 = vadd.f32 %v1527, 2.0
          %v1656 = vadd.f32 %v1528, 2.0
          %v1657 = vadd.f32 %v1529, 2.0
          %v1658 = vadd.f32 %v1530, 2.0
          %v1659 = vadd.f32 %v1531, 2.0
          %v1660 = vadd.f32 %v1532, 2.0
          %v1661 = vadd.f32 %v1533, 2.0
          %v1662 = vadd.f32 %v1534, 2.0
          %v1663 = vadd.f32 %v1535, 2.0
          %v1664 = vadd.f32 %v1536, 2.0
          %v1665 = vadd.f32 %v1537, 2.0
          %v1666 = vadd.f32 %v1538, 2.0
          %v1667 = vadd.f32 %v1539, 2.0
          %v1668 = vadd.f32 %v1540, 2.0
          %v1669 = vadd.f32 %v1541, 2.0
          %v1670 = vadd.f32 %v1542, 2.0
          %v1671 = vadd.f32 %v1543, 2.0
          %v1672 = vadd.f32 %v1544, 2.0
          %v1673 = vadd.f32 %v1545, 2.0
          %v1674 = vadd.f32 %v1546, 2.0
          %v1675 = vadd.f32 %v1547, 2.0
          %v1676 = vadd.f32 %v1548, 2.0
          %v1677 = vadd.f32 %v1549, 2.0
          %v1678 = vadd.f32 %v1550, 2.0
          %v1679 = vadd.f32 %v1551, 2.0
          %v1680 = vadd.f32 %v1552, 2.0
          %v1681 = vadd.f32 %v1553, 2.0
          %v1682 = vadd.f32 %v1554, 2.0
          %v1683 = vadd.f32 %v1555, 2.0
          %v1684 = vadd.f32 %v1556, 2.0
          %v1685 = vadd.f32 %v1557, 2.0
          %v1686 = vadd.f32 %v1558, 2.0
          %v1687 = vadd.f32 %v1559, 2.0
          %v1688 = vadd.f32 %v1560, 2.0
          %v1689 = vadd.f32 %v1561, 2.0
          %v1690 = vadd.f32 %v1562, 2.0
          %v1691 = vadd.f32 %v1563, 2.0
          %v1692 = vrcp.pop %v1628
          %v1693 = vrcp.pop %v1629
          %v1694 = vrcp.pop %v1630
          %v1695 = vrcp.pop %v1631
          %v1696 = vrcp.pop %v1632
          %v1697 = vrcp.pop %v1633
          %v1698 = vrcp.pop %v1634
          %v1699 = vrcp.pop %v1635
          %v1700 = vrcp.pop %v1636
          %v1701 = vrcp.pop %v1637
          %v1702 = vrcp.pop %v1638
          %v1703 = vrcp.pop %v1639
          %v1704 = vrcp.pop %v1640
          %v1705 = vrcp.pop %v1641
          %v1706 = vrcp.pop %v1642
          %v1707 = vrcp.pop %v1643
          %v1708 = vrcp.pop %v1644
          %v1709 = vrcp.pop %v1645
          %v1710 = vrcp.pop %v1646
          %v1711 = vrcp.pop %v1647
          %v1712 = vrcp.pop %v1648
          %v1713 = vrcp.pop %v1649
          %v1714 = vrcp.pop %v1650
          %v1715 = vrcp.pop %v1651
          %v1716 = vrcp.pop %v1652
          %v1717 = vrcp.pop %v1653
          %v1718 = vrcp.pop %v1654
          %v1719 = vrcp.pop %v1655
          %v1720 = vrcp.pop %v1656
          %v1721 = vrcp.pop %v1657
          %v1722 = vrcp.pop %v1658
          %v1723 = vrcp.pop %v1659
          %v1724 = vrcp.pop %v1660
          %v1725 = vrcp.pop %v1661
          %v1726 = vrcp.pop %v1662
          %v1727 = vrcp.pop %v1663
          %v1728 = vrcp.pop %v1664
          %v1729 = vrcp.pop %v1665
          %v1730 = vrcp.pop %v1666
          %v1731 = vrcp.pop %v1667
          %v1732 = vrcp.pop %v1668
          %v1733 = vrcp.pop %v1669
          %v1734 = vrcp.pop %v1670
          %v1735 = vrcp.pop %v1671
          %v1736 = vrcp.pop %v1672
          %v1737 = vrcp.pop %v1673
          %v1738 = vrcp.pop %v1674
          %v1739 = vrcp.pop %v1675
          %v1740 = vrcp.pop %v1676
          %v1741 = vrcp.pop %v1677
          %v1742 = vrcp.pop %v1678
          %v1743 = vrcp.pop %v1679
          %v1744 = vrcp.pop %v1680
          %v1745 = vrcp.pop %v1681
          %v1746 = vrcp.pop %v1682
          %v1747 = vrcp.pop %v1683
          %v1748 = vrcp.pop %v1684
          %v1749 = vrcp.pop %v1685
          %v1750 = vrcp.pop %v1686
          %v1751 = vrcp.pop %v1687
          %v1752 = vrcp.pop %v1688
          %v1753 = vrcp.pop %v1689
          %v1754 = vrcp.pop %v1690
          %v1755 = vrcp.pop %v1691
          %v1756 = vmul.f32 %v1564, %v1692
          %v1757 = vmul.f32 %v1565, %v1693
          %v1758 = vmul.f32 %v1566, %v1694
          %v1759 = vmul.f32 %v1567, %v1695
          %v1760 = vmul.f32 %v1568, %v1696
          %v1761 = vmul.f32 %v1569, %v1697
          %v1762 = vmul.f32 %v1570, %v1698
          %v1763 = vmul.f32 %v1571, %v1699
          %v1764 = vmul.f32 %v1572, %v1700
          %v1765 = vmul.f32 %v1573, %v1701
          %v1766 = vmul.f32 %v1574, %v1702
          %v1767 = vmul.f32 %v1575, %v1703
          %v1768 = vmul.f32 %v1576, %v1704
          %v1769 = vmul.f32 %v1577, %v1705
          %v1770 = vmul.f32 %v1578, %v1706
          %v1771 = vmul.f32 %v1579, %v1707
          %v1772 = vmul.f32 %v1580, %v1708
          %v1773 = vmul.f32 %v1581, %v1709
          %v1774 = vmul.f32 %v1582, %v1710
          %v1775 = vmul.f32 %v1583, %v1711
          %v1776 = vmul.f32 %v1584, %v1712
          %v1777 = vmul.f32 %v1585, %v1713
          %v1778 = vmul.f32 %v1586, %v1714
          %v1779 = vmul.f32 %v1587, %v1715
          %v1780 = vmul.f32 %v1588, %v1716
          %v1781 = vmul.f32 %v1589, %v1717
          %v1782 = vmul.f32 %v1590, %v1718
          %v1783 = vmul.f32 %v1591, %v1719
          %v1784 = vmul.f32 %v1592, %v1720
          %v1785 = vmul.f32 %v1593, %v1721
          %v1786 = vmul.f32 %v1594, %v1722
          %v1787 = vmul.f32 %v1595, %v1723
          %v1788 = vmul.f32 %v1596, %v1724
          %v1789 = vmul.f32 %v1597, %v1725
          %v1790 = vmul.f32 %v1598, %v1726
          %v1791 = vmul.f32 %v1599, %v1727
          %v1792 = vmul.f32 %v1600, %v1728
          %v1793 = vmul.f32 %v1601, %v1729
          %v1794 = vmul.f32 %v1602, %v1730
          %v1795 = vmul.f32 %v1603, %v1731
          %v1796 = vmul.f32 %v1604, %v1732
          %v1797 = vmul.f32 %v1605, %v1733
          %v1798 = vmul.f32 %v1606, %v1734
          %v1799 = vmul.f32 %v1607, %v1735
          %v1800 = vmul.f32 %v1608, %v1736
          %v1801 = vmul.f32 %v1609, %v1737
          %v1802 = vmul.f32 %v1610, %v1738
          %v1803 = vmul.f32 %v1611, %v1739
          %v1804 = vmul.f32 %v1612, %v1740
          %v1805 = vmul.f32 %v1613, %v1741
          %v1806 = vmul.f32 %v1614, %v1742
          %v1807 = vmul.f32 %v1615, %v1743
          %v1808 = vmul.f32 %v1616, %v1744
          %v1809 = vmul.f32 %v1617, %v1745
          %v1810 = vmul.f32 %v1618, %v1746
          %v1811 = vmul.f32 %v1619, %v1747
          %v1812 = vmul.f32 %v1620, %v1748
          %v1813 = vmul.f32 %v1621, %v1749
          %v1814 = vmul.f32 %v1622, %v1750
          %v1815 = vmul.f32 %v1623, %v1751
          %v1816 = vmul.f32 %v1624, %v1752
          %v1817 = vmul.f32 %v1625, %v1753
          %v1818 = vmul.f32 %v1626, %v1754
          %v1819 = vmul.f32 %v1627, %v1755
          %v1820 = vpack.c.bf16 %v1756, %v1756
          %v1821 = vpack.c.bf16 %v1757, %v1757
          %v1822 = vpack.c.bf16 %v1758, %v1758
          %v1823 = vpack.c.bf16 %v1759, %v1759
          %v1824 = vpack.c.bf16 %v1760, %v1760
          %v1825 = vpack.c.bf16 %v1761, %v1761
          %v1826 = vpack.c.bf16 %v1762, %v1762
          %v1827 = vpack.c.bf16 %v1763, %v1763
          %v1828 = vpack.c.bf16 %v1764, %v1764
          %v1829 = vpack.c.bf16 %v1765, %v1765
          %v1830 = vpack.c.bf16 %v1766, %v1766
          %v1831 = vpack.c.bf16 %v1767, %v1767
          %v1832 = vpack.c.bf16 %v1768, %v1768
          %v1833 = vpack.c.bf16 %v1769, %v1769
          %v1834 = vpack.c.bf16 %v1770, %v1770
          %v1835 = vpack.c.bf16 %v1771, %v1771
          %v1836 = vpack.c.bf16 %v1772, %v1772
          %v1837 = vpack.c.bf16 %v1773, %v1773
          %v1838 = vpack.c.bf16 %v1774, %v1774
          %v1839 = vpack.c.bf16 %v1775, %v1775
          %v1840 = vpack.c.bf16 %v1776, %v1776
          %v1841 = vpack.c.bf16 %v1777, %v1777
          %v1842 = vpack.c.bf16 %v1778, %v1778
          %v1843 = vpack.c.bf16 %v1779, %v1779
          %v1844 = vpack.c.bf16 %v1780, %v1780
          %v1845 = vpack.c.bf16 %v1781, %v1781
          %v1846 = vpack.c.bf16 %v1782, %v1782
          %v1847 = vpack.c.bf16 %v1783, %v1783
          %v1848 = vpack.c.bf16 %v1784, %v1784
          %v1849 = vpack.c.bf16 %v1785, %v1785
          %v1850 = vpack.c.bf16 %v1786, %v1786
          %v1851 = vpack.c.bf16 %v1787, %v1787
          %v1852 = vpack.c.bf16 %v1788, %v1788
          %v1853 = vpack.c.bf16 %v1789, %v1789
          %v1854 = vpack.c.bf16 %v1790, %v1790
          %v1855 = vpack.c.bf16 %v1791, %v1791
          %v1856 = vpack.c.bf16 %v1792, %v1792
          %v1857 = vpack.c.bf16 %v1793, %v1793
          %v1858 = vpack.c.bf16 %v1794, %v1794
          %v1859 = vpack.c.bf16 %v1795, %v1795
          %v1860 = vpack.c.bf16 %v1796, %v1796
          %v1861 = vpack.c.bf16 %v1797, %v1797
          %v1862 = vpack.c.bf16 %v1798, %v1798
          %v1863 = vpack.c.bf16 %v1799, %v1799
          %v1864 = vpack.c.bf16 %v1800, %v1800
          %v1865 = vpack.c.bf16 %v1801, %v1801
          %v1866 = vpack.c.bf16 %v1802, %v1802
          %v1867 = vpack.c.bf16 %v1803, %v1803
          %v1868 = vpack.c.bf16 %v1804, %v1804
          %v1869 = vpack.c.bf16 %v1805, %v1805
          %v1870 = vpack.c.bf16 %v1806, %v1806
          %v1871 = vpack.c.bf16 %v1807, %v1807
          %v1872 = vpack.c.bf16 %v1808, %v1808
          %v1873 = vpack.c.bf16 %v1809, %v1809
          %v1874 = vpack.c.bf16 %v1810, %v1810
          %v1875 = vpack.c.bf16 %v1811, %v1811
          %v1876 = vpack.c.bf16 %v1812, %v1812
          %v1877 = vpack.c.bf16 %v1813, %v1813
          %v1878 = vpack.c.bf16 %v1814, %v1814
          %v1879 = vpack.c.bf16 %v1815, %v1815
          %v1880 = vpack.c.bf16 %v1816, %v1816
          %v1881 = vpack.c.bf16 %v1817, %v1817
          %v1882 = vpack.c.bf16 %v1818, %v1818
          %v1883 = vpack.c.bf16 %v1819, %v1819
          %1884 = vst [vmem:[%s266] sm:$0xf] %v1820
          %1885 = vst [vmem:[%s266 + $0x4] sm:$0xf] %v1821
          %1886 = vst [vmem:[%s266 + $0x8] sm:$0xf] %v1822
          %1887 = vst [vmem:[%s266 + $0xc] sm:$0xf] %v1823
          %1888 = vst [vmem:[%s266 + $0x10] sm:$0xf] %v1824
          %1889 = vst [vmem:[%s266 + $0x14] sm:$0xf] %v1825
          %1890 = vst [vmem:[%s266 + $0x18] sm:$0xf] %v1826
          %1891 = vst [vmem:[%s266 + $0x1c] sm:$0xf] %v1827
          %1892 = vst [vmem:[%s266 + $0x20] sm:$0xf] %v1828
          %1893 = vst [vmem:[%s266 + $0x24] sm:$0xf] %v1829
          %1894 = vst [vmem:[%s266 + $0x28] sm:$0xf] %v1830
          %1895 = vst [vmem:[%s266 + $0x2c] sm:$0xf] %v1831
          %1896 = vst [vmem:[%s266 + $0x30] sm:$0xf] %v1832
          %1897 = vst [vmem:[%s266 + $0x34] sm:$0xf] %v1833
          %1898 = vst [vmem:[%s266 + $0x38] sm:$0xf] %v1834
          %1899 = vst [vmem:[%s266 + $0x3c] sm:$0xf] %v1835
          %1900 = vst [vmem:[%s266 + $0x40] sm:$0xf] %v1836
          %1901 = vst [vmem:[%s266 + $0x44] sm:$0xf] %v1837
          %1902 = vst [vmem:[%s266 + $0x48] sm:$0xf] %v1838
          %1903 = vst [vmem:[%s266 + $0x4c] sm:$0xf] %v1839
          %1904 = vst [vmem:[%s266 + $0x50] sm:$0xf] %v1840
          %1905 = vst [vmem:[%s266 + $0x54] sm:$0xf] %v1841
          %1906 = vst [vmem:[%s266 + $0x58] sm:$0xf] %v1842
          %1907 = vst [vmem:[%s266 + $0x5c] sm:$0xf] %v1843
          %1908 = vst [vmem:[%s266 + $0x60] sm:$0xf] %v1844
          %1909 = vst [vmem:[%s266 + $0x64] sm:$0xf] %v1845
          %1910 = vst [vmem:[%s266 + $0x68] sm:$0xf] %v1846
          %1911 = vst [vmem:[%s266 + $0x6c] sm:$0xf] %v1847
          %1912 = vst [vmem:[%s266 + $0x70] sm:$0xf] %v1848
          %1913 = vst [vmem:[%s266 + $0x74] sm:$0xf] %v1849
          %1914 = vst [vmem:[%s266 + $0x78] sm:$0xf] %v1850
          %1915 = vst [vmem:[%s266 + $0x7c] sm:$0xf] %v1851
          %1916 = vst [vmem:[%s266 + $0x80] sm:$0xf] %v1852
          %1917 = vst [vmem:[%s266 + $0x84] sm:$0xf] %v1853
          %1918 = vst [vmem:[%s266 + $0x88] sm:$0xf] %v1854
          %1919 = vst [vmem:[%s266 + $0x8c] sm:$0xf] %v1855
          %1920 = vst [vmem:[%s266 + $0x90] sm:$0xf] %v1856
          %1921 = vst [vmem:[%s266 + $0x94] sm:$0xf] %v1857
          %1922 = vst [vmem:[%s266 + $0x98] sm:$0xf] %v1858
          %1923 = vst [vmem:[%s266 + $0x9c] sm:$0xf] %v1859
          %1924 = vst [vmem:[%s266 + $0xa0] sm:$0xf] %v1860
          %1925 = vst [vmem:[%s266 + $0xa4] sm:$0xf] %v1861
          %1926 = vst [vmem:[%s266 + $0xa8] sm:$0xf] %v1862
          %1927 = vst [vmem:[%s266 + $0xac] sm:$0xf] %v1863
          %1928 = vst [vmem:[%s266 + $0xb0] sm:$0xf] %v1864
          %1929 = vst [vmem:[%s266 + $0xb4] sm:$0xf] %v1865
          %1930 = vst [vmem:[%s266 + $0xb8] sm:$0xf] %v1866
          %1931 = vst [vmem:[%s266 + $0xbc] sm:$0xf] %v1867
          %1932 = vst [vmem:[%s266 + $0xc0] sm:$0xf] %v1868
          %1933 = vst [vmem:[%s266 + $0xc4] sm:$0xf] %v1869
          %1934 = vst [vmem:[%s266 + $0xc8] sm:$0xf] %v1870
          %1935 = vst [vmem:[%s266 + $0xcc] sm:$0xf] %v1871
          %1936 = vst [vmem:[%s266 + $0xd0] sm:$0xf] %v1872
          %1937 = vst [vmem:[%s266 + $0xd4] sm:$0xf] %v1873
          %1938 = vst [vmem:[%s266 + $0xd8] sm:$0xf] %v1874
          %1939 = vst [vmem:[%s266 + $0xdc] sm:$0xf] %v1875
          %1940 = vst [vmem:[%s266 + $0xe0] sm:$0xf] %v1876
          %1941 = vst [vmem:[%s266 + $0xe4] sm:$0xf] %v1877
          %1942 = vst [vmem:[%s266 + $0xe8] sm:$0xf] %v1878
          %1943 = vst [vmem:[%s266 + $0xec] sm:$0xf] %v1879
          %1944 = vst [vmem:[%s266 + $0xf0] sm:$0xf] %v1880
          %1945 = vst [vmem:[%s266 + $0xf4] sm:$0xf] %v1881
          %1946 = vst [vmem:[%s266 + $0xf8] sm:$0xf] %v1882
          %1947 = vst [vmem:[%s266 + $0xfc] sm:$0xf] %v1883
        $region44: #{_conv_im2col.1} parent=35 // pred_fallthru
          _
        %s1948 = sand.u32 %s155, 1
        %s1949 = scalar_lea.sflag [#allocation4], %s1948
        %s1950 = sand.u32 %s155, 1
        %s1951 = smul.addr %s1950, 256
        %s1952 = scalar_lea.vmem [#allocation3], %s1951
        // Predicated region
        $region45: #{_conv_im2col.1} parent=35 // pred_check
          %p1953 = pneg %p165
        $region46: #{_conv_im2col.1} parent=35 // pred_check_branch
          %1955 = sbr.rel (%p1953) target = $region48
        $region47: #{_conv_im2col.1} parent=35 // pred_region
          %s1956 = smul.u32 64, %s23
          %1958 = vsyncadd %s1949, 0
          %s1959 = sadd.s32 %s24, %s1956
          %s1960 = smul.addr %s1959, 4
          %s1961 = scalar_lea.hbm %s4, %s1960
          %s1962 = sshll.u32 %s1952, 4
          %s1963 = int_to_ptr.vmem [resolvable:$true] %s1962
          %s1964 = sshll.u32 %s1961, 4
          %s1965 = int_to_ptr.hbm [resolvable:$true] %s1964
          %1970 = dma.vmem_to_hbm [thread:$0]  %s1963, 4096, %s1965, %s1949, 64, 64, 4
        $region48: #{_conv_im2col.1} parent=35 // pred_fallthru
          _
      $region36: #{_conv_im2col.1} parent=5 // pred_fallthru
        _
      %p1971 = scmp.le.s32.totalorder 2, %s13
      // Predicated region
      $region49: #{_conv_im2col.1} parent=5 // pred_check
        %p1972 = pneg %p1971
      $region50: #{_conv_im2col.1} parent=5 // pred_check_branch
        %1974 = sbr.rel (%p1972) target = $region52
      $region51: #{_conv_im2col.1} parent=5 // pred_region
        %s1975 = ssub.s32 %s13, 2
        // Predicated region
        $region53: #{_conv_im2col.1} parent=51 // pred_check
          %p1976 = pneg %p171
        $region54: #{_conv_im2col.1} parent=51 // pred_check_branch
          %1978 = sbr.rel (%p1976) target = $region56
        $region55: #{_conv_im2col.1} parent=51 // pred_region
          %s1979 = sand.u32 %s156, 1
          %s1980 = scalar_lea.sflag [#allocation4], %s1979
          %s1981 = sand.u32 %s156, 1
          %s1982 = smul.addr %s1981, 256
          %s1983 = scalar_lea.vmem [#allocation3], %s1982
          %1985 = dma.done %s1980, 4096
        $region56: #{_conv_im2col.1} parent=51 // pred_fallthru
          _
      $region52: #{_conv_im2col.1} parent=5 // pred_fallthru
        _
    $region6: #{_conv_im2col.1} parent=1 // loop_footer
      %s17 = sadd.s32 1, %s13
    $region7: #{_conv_im2col.1} parent=1 // loop_footer_branch
      %12 = sbr.rel target = $region3
    $region8: #{_conv_im2col.1} parent=1 // loop_exit
      _
    %1986 = vsyncpa [#allocation4], 1
    %s1987 = scalar_lea.sflag [#allocation4], 1
    %1988 = vsyncpa %s1987, 1

</llo_original>
